<compile_context>
chip_gen: v7x
topology: tpu7x:2x2x1
jax: 0.10.0
libtpu: 0.0.40
codegen_flags: <defaults>
</compile_context>

<pallas_src>
import numpy as np
import jax
import jax.numpy as jnp
from jax.experimental import pallas as pl
from jax.experimental.pallas import tpu as pltpu

BN_EPS = 1e-5
LANE = 128


# ----------------------------- Pallas kernels ------------------------------ #

def _stage_kernel(a_ref, w_ref, shift_ref, o_ref):
    """Fused 3x3 conv (+folded BN) + ReLU + 2x2/2 max-pool.

    a_ref:     (4, Mb, 9*Cin) bf16  im2col rows grouped by pool-window corner
    w_ref:     (9*Cin, 128)   bf16  conv weights with BN scale folded in
    shift_ref: (1, 128)       f32   folded BN shift (+ conv bias)
    o_ref:     (Mb, 128)      f32   pooled activations (lane-dense)
    """
    w = w_ref[...]
    shift = shift_ref[...]

    def corner(k):
        y = jnp.dot(a_ref[k], w, preferred_element_type=jnp.float32)
        return jnp.maximum(y + shift, 0.0)

    o_ref[...] = jnp.maximum(jnp.maximum(corner(0), corner(1)),
                             jnp.maximum(corner(2), corner(3)))


def _stage_head_kernel(a_ref, w_ref, shift_ref, wh_ref, bh_ref, o_ref):
    """Last backbone stage fused with the 1x1 detection head (per-pixel matmul)."""
    w = w_ref[...]
    shift = shift_ref[...]

    def corner(k):
        y = jnp.dot(a_ref[k], w, preferred_element_type=jnp.float32)
        return jnp.maximum(y + shift, 0.0)

    pooled = jnp.maximum(jnp.maximum(corner(0), corner(1)),
                         jnp.maximum(corner(2), corner(3)))
    o_ref[...] = jnp.dot(pooled.astype(jnp.bfloat16), wh_ref[...],
                         preferred_element_type=jnp.float32) + bh_ref[...]


# ------------------------------- glue / wrappers ---------------------------- #

def _corner_im2col(x_nhwc):
    """(N,H,W,Cin) -> (4, N*Hq*Wq, 9*Cin) bf16, rows grouped by 2x2-pool corner."""
    N, H, W, Cin = x_nhwc.shape
    Hq, Wq = H // 2, W // 2
    xpad = jnp.pad(x_nhwc, ((0, 0), (1, 1), (1, 1), (0, 0)))
    patches = [xpad[:, dy:dy + H, dx:dx + W, :]
               for dy in range(3) for dx in range(3)]
    A = jnp.concatenate(patches, axis=-1)                       # (N,H,W,9*Cin)
    A = A.reshape(N, Hq, 2, Wq, 2, 9 * Cin)
    A4 = jnp.transpose(A, (2, 4, 0, 1, 3, 5)).reshape(4, N * Hq * Wq, 9 * Cin)
    return A4.astype(jnp.bfloat16)


def _fold_bn(w_hwio, conv_b, gamma, beta, rmean, rvar):
    """Fold eval-mode BN (+conv bias) into the weights; pad Cout to 128 lanes."""
    kh, kw, cin, cout = w_hwio.shape
    sc = gamma / jnp.sqrt(rvar + BN_EPS)
    wf = w_hwio.reshape(kh * kw * cin, cout) * sc[None, :]
    shift = (conv_b - rmean) * sc + beta
    pad = max(0, LANE - cout)
    wf = jnp.pad(wf, ((0, 0), (0, pad))).astype(jnp.bfloat16)
    shift = jnp.pad(shift, (0, pad)).reshape(1, -1).astype(jnp.float32)
    return wf, shift, cout


def _run_stage(A4, wf, shift, *, m_blocks=1):
    _, M, K = A4.shape
    C = wf.shape[1]
    Mb = M // m_blocks
    return pl.pallas_call(
        _stage_kernel,
        out_shape=jax.ShapeDtypeStruct((M, C), jnp.float32),
        grid=(m_blocks,),
        in_specs=[
            pl.BlockSpec((4, Mb, K), lambda m: (0, m, 0)),
            pl.BlockSpec((K, C), lambda m: (0, 0)),
            pl.BlockSpec((1, C), lambda m: (0, 0)),
        ],
        out_specs=pl.BlockSpec((Mb, C), lambda m: (m, 0)),
        compiler_params=pltpu.CompilerParams(dimension_semantics=("parallel",)),
    )(A4, wf, shift)


def _run_stage_with_head(A4, wf, shift, wh, bh):
    _, M, K = A4.shape
    Cs = wf.shape[1]
    Ch = wh.shape[1]
    return pl.pallas_call(
        _stage_head_kernel,
        out_shape=jax.ShapeDtypeStruct((M, Ch), jnp.float32),
        grid=(1,),
        in_specs=[
            pl.BlockSpec((4, M, K), lambda m: (0, 0, 0)),
            pl.BlockSpec((K, Cs), lambda m: (0, 0)),
            pl.BlockSpec((1, Cs), lambda m: (0, 0)),
            pl.BlockSpec((Cs, Ch), lambda m: (0, 0)),
            pl.BlockSpec((1, Ch), lambda m: (0, 0)),
        ],
        out_specs=pl.BlockSpec((M, Ch), lambda m: (0, 0)),
        compiler_params=pltpu.CompilerParams(dimension_semantics=("parallel",)),
    )(A4, wf, shift, wh, bh)


def yolo_forward(x_nchw, params):
    x = jnp.transpose(x_nchw, (0, 2, 3, 1)).astype(jnp.float32)   # NCHW -> NHWC
    N = x.shape[0]
    stages = params["stages"]
    wh_hwio, bh = params["head"]

    # Stages 1..n-1: fused conv+BN+ReLU+pool kernels.
    for s, p in enumerate(stages[:-1]):
        wf, shift, cout = _fold_bn(*p)
        Hq, Wq = x.shape[1] // 2, x.shape[2] // 2
        A4 = _corner_im2col(x)
        out = _run_stage(A4, wf, shift, m_blocks=2 if s == 0 else 1)
        x = out[:, :cout].reshape(N, Hq, Wq, cout)

    # Last stage fused with the 1x1 detection head (lane-dense 128-wide output).
    wf, shift, _ = _fold_bn(*stages[-1])
    Hq, Wq = x.shape[1] // 2, x.shape[2] // 2
    A4 = _corner_im2col(x)
    head_cout = wh_hwio.shape[-1]
    cs = wf.shape[1]
    whp = jnp.pad(wh_hwio.reshape(-1, head_cout),
                  ((0, cs - wh_hwio.shape[2]), (0, LANE - head_cout))
                  ).astype(jnp.bfloat16)
    bhp = jnp.pad(bh, (0, LANE - head_cout)).reshape(1, -1).astype(jnp.float32)
    out = _run_stage_with_head(A4, wf, shift, whp, bhp)
    # NHWC result == detector(features).permute(0, 2, 3, 1).contiguous()
    return out[:, :head_cout].reshape(N, Hq, Wq, head_cout)


# ------------------------------ pure-JAX reference -------------------------- #

def reference_forward(x_nchw, params):
    x = x_nchw
    for (w, b, gamma, beta, rmean, rvar) in params["stages"]:
        y = jax.lax.conv_general_dilated(
            x, w, window_strides=(1, 1), padding=((1, 1), (1, 1)),
            dimension_numbers=("NCHW", "HWIO", "NCHW"))
        y = y + b[None, :, None, None]
        y = (y - rmean[None, :, None, None]) / \
            jnp.sqrt(rvar + BN_EPS)[None, :, None, None]
        y = y * gamma[None, :, None, None] + beta[None, :, None, None]
        y = jnp.maximum(y, 0.0)
        x = jax.lax.reduce_window(y, -jnp.inf, jax.lax.max,
                                  (1, 1, 2, 2), (1, 1, 2, 2), "VALID")
    wh, bh = params["head"]
    y = jax.lax.conv_general_dilated(
        x, wh, window_strides=(1, 1), padding=((0, 0), (0, 0)),
        dimension_numbers=("NCHW", "HWIO", "NCHW"))
    y = y + bh[None, :, None, None]
    return jnp.transpose(y, (0, 2, 3, 1))


# ----------------------------------- main ----------------------------------- #

if __name__ == "__main__":
    key = jax.random.PRNGKey(0)
    keys = jax.random.split(key, 16)

    def conv_init(kw, kb, cin, cout, ksize):
        fan_in = ksize * ksize * cin
        w = jax.random.normal(kw, (ksize, ksize, cin, cout),
                              jnp.float32) / np.sqrt(fan_in)
        b = 0.1 * jax.random.normal(kb, (cout,), jnp.float32)
        return w, b

    def bn_init(k, c):
        k1, k2, k3, k4 = jax.random.split(k, 4)
        gamma = 1.0 + 0.1 * jax.random.normal(k1, (c,), jnp.float32)
        beta = 0.1 * jax.random.normal(k2, (c,), jnp.float32)
        rmean = 0.1 * jax.random.normal(k3, (c,), jnp.float32)
        rvar = 1.0 + 0.1 * jnp.abs(jax.random.normal(k4, (c,), jnp.float32))
        return gamma, beta, rmean, rvar

    chans = [(3, 32), (32, 64), (64, 128)]
    stages = []
    for s, (cin, cout) in enumerate(chans):
        w, b = conv_init(keys[3 * s], keys[3 * s + 1], cin, cout, 3)
        stages.append((w, b) + bn_init(keys[3 * s + 2], cout))

    num_classes, num_anchors = 20, 3
    head_out = num_anchors * (5 + num_classes)            # 75
    wh, bh = conv_init(keys[10], keys[11], 128, head_out, 1)
    params = {"stages": stages, "head": (wh, bh)}

    # small NCHW input: batch=2, channels=3, spatial=16  ->  output (2, 2, 2, 75)
    x = jax.random.normal(keys[12], (2, 3, 16, 16), jnp.float32)

    fwd = jax.jit(yolo_forward)
    out = jax.block_until_ready(fwd(x, params))
    assert out.shape == (2, 2, 2, 75), out.shape

    ref = jax.block_until_ready(reference_forward(x, params))
    np.testing.assert_allclose(np.asarray(out), np.asarray(ref),
                               rtol=5e-2, atol=5e-2)

    print("KERNEL_OK")
</pallas_src>

<mosaic_0001>
module attributes {stable_mosaic.version = 11 : i64} {
  func.func @_stage_kernel(%arg0: i32, %arg1: memref<4x64x27xbf16, #tpu.memory_space<vmem>>, %arg2: memref<27x128xbf16, #tpu.memory_space<vmem>>, %arg3: memref<1x128xf32, #tpu.memory_space<vmem>>, %arg4: memref<64x128xf32, #tpu.memory_space<vmem>>) attributes {dimension_semantics = [#tpu.dimension_semantics<parallel>], iteration_bounds = array<i64: 2>, scalar_prefetch = 0 : i64, scratch_operands = 0 : i64, tpu.core_type = #tpu.core_type<tc>, window_params = [{transform_indices = @transform_0, window_bounds = array<i64: 4, 64, 27>}, {pipeline_mode = #tpu.pipeline_mode<synchronous>, transform_indices = @transform_1, window_bounds = array<i64: 27, 128>}, {pipeline_mode = #tpu.pipeline_mode<synchronous>, transform_indices = @transform_2, window_bounds = array<i64: 1, 128>}, {transform_indices = @transform_3, window_bounds = array<i64: 64, 128>}]} {
    %c0 = arith.constant 0 : index
    %c0_0 = arith.constant 0 : index
    %0 = vector.load %arg2[%c0, %c0_0] : memref<27x128xbf16, #tpu.memory_space<vmem>>, vector<27x128xbf16>
    %c0_1 = arith.constant 0 : index
    %c0_2 = arith.constant 0 : index
    %1 = vector.load %arg3[%c0_1, %c0_2] : memref<1x128xf32, #tpu.memory_space<vmem>>, vector<1x128xf32>
    %c0_3 = arith.constant 0 : index
    %c0_4 = arith.constant 0 : index
    %c0_5 = arith.constant 0 : index
    %2 = vector.load %arg1[%c0_3, %c0_4, %c0_5] : memref<4x64x27xbf16, #tpu.memory_space<vmem>>, vector<1x64x27xbf16>
    %3 = vector.shape_cast %2 : vector<1x64x27xbf16> to vector<64x27xbf16>
    %cst = arith.constant dense<0.000000e+00> : vector<64x128xf32>
    %4 = tpu.matmul %3, %0, %cst {dimension_numbers = #tpu.dot_dimension_numbers<[1], [0], [0], [1], [0, 0, 1, 1], [], []>} : vector<64x27xbf16>, vector<27x128xbf16>, vector<64x128xf32> -> vector<64x128xf32>
    %5 = vector.broadcast %1 : vector<1x128xf32> to vector<64x128xf32>
    %6 = arith.addf %4, %5 : vector<64x128xf32>
    %cst_6 = arith.constant 0.000000e+00 : f32
    %7 = vector.broadcast %cst_6 : f32 to vector<64x128xf32>
    %8 = arith.maximumf %6, %7 : vector<64x128xf32>
    %c1 = arith.constant 1 : index
    %c0_7 = arith.constant 0 : index
    %c0_8 = arith.constant 0 : index
    %9 = vector.load %arg1[%c1, %c0_7, %c0_8] : memref<4x64x27xbf16, #tpu.memory_space<vmem>>, vector<1x64x27xbf16>
    %10 = vector.shape_cast %9 : vector<1x64x27xbf16> to vector<64x27xbf16>
    %cst_9 = arith.constant dense<0.000000e+00> : vector<64x128xf32>
    %11 = tpu.matmul %10, %0, %cst_9 {dimension_numbers = #tpu.dot_dimension_numbers<[1], [0], [0], [1], [0, 0, 1, 1], [], []>} : vector<64x27xbf16>, vector<27x128xbf16>, vector<64x128xf32> -> vector<64x128xf32>
    %12 = vector.broadcast %1 : vector<1x128xf32> to vector<64x128xf32>
    %13 = arith.addf %11, %12 : vector<64x128xf32>
    %cst_10 = arith.constant 0.000000e+00 : f32
    %14 = vector.broadcast %cst_10 : f32 to vector<64x128xf32>
    %15 = arith.maximumf %13, %14 : vector<64x128xf32>
    %16 = arith.maximumf %8, %15 : vector<64x128xf32>
    %c2 = arith.constant 2 : index
    %c0_11 = arith.constant 0 : index
    %c0_12 = arith.constant 0 : index
    %17 = vector.load %arg1[%c2, %c0_11, %c0_12] : memref<4x64x27xbf16, #tpu.memory_space<vmem>>, vector<1x64x27xbf16>
    %18 = vector.shape_cast %17 : vector<1x64x27xbf16> to vector<64x27xbf16>
    %cst_13 = arith.constant dense<0.000000e+00> : vector<64x128xf32>
    %19 = tpu.matmul %18, %0, %cst_13 {dimension_numbers = #tpu.dot_dimension_numbers<[1], [0], [0], [1], [0, 0, 1, 1], [], []>} : vector<64x27xbf16>, vector<27x128xbf16>, vector<64x128xf32> -> vector<64x128xf32>
    %20 = vector.broadcast %1 : vector<1x128xf32> to vector<64x128xf32>
    %21 = arith.addf %19, %20 : vector<64x128xf32>
    %cst_14 = arith.constant 0.000000e+00 : f32
    %22 = vector.broadcast %cst_14 : f32 to vector<64x128xf32>
    %23 = arith.maximumf %21, %22 : vector<64x128xf32>
    %c3 = arith.constant 3 : index
    %c0_15 = arith.constant 0 : index
    %c0_16 = arith.constant 0 : index
    %24 = vector.load %arg1[%c3, %c0_15, %c0_16] : memref<4x64x27xbf16, #tpu.memory_space<vmem>>, vector<1x64x27xbf16>
    %25 = vector.shape_cast %24 : vector<1x64x27xbf16> to vector<64x27xbf16>
    %cst_17 = arith.constant dense<0.000000e+00> : vector<64x128xf32>
    %26 = tpu.matmul %25, %0, %cst_17 {dimension_numbers = #tpu.dot_dimension_numbers<[1], [0], [0], [1], [0, 0, 1, 1], [], []>} : vector<64x27xbf16>, vector<27x128xbf16>, vector<64x128xf32> -> vector<64x128xf32>
    %27 = vector.broadcast %1 : vector<1x128xf32> to vector<64x128xf32>
    %28 = arith.addf %26, %27 : vector<64x128xf32>
    %cst_18 = arith.constant 0.000000e+00 : f32
    %29 = vector.broadcast %cst_18 : f32 to vector<64x128xf32>
    %30 = arith.maximumf %28, %29 : vector<64x128xf32>
    %31 = arith.maximumf %23, %30 : vector<64x128xf32>
    %32 = arith.maximumf %16, %31 : vector<64x128xf32>
    %c0_19 = arith.constant 0 : index
    %c0_20 = arith.constant 0 : index
    %33 = vector.load %arg4[%c0_19, %c0_20] : memref<64x128xf32, #tpu.memory_space<vmem>>, vector<64x128xf32>
    tpu.vector_store %arg4[%c0_19, %c0_20], %32 {strides = array<i32>} : memref<64x128xf32, #tpu.memory_space<vmem>>, vector<64x128xf32>,
    return
  }
  func.func @transform_0(%arg0: i32) -> (i32, i32, i32) {
    %c0_i32 = arith.constant 0 : i32
    %c0_i32_0 = arith.constant 0 : i32
    %c0_i32_1 = arith.constant 0 : i32
    return %c0_i32, %arg0, %c0_i32_0 : i32, i32, i32
  }
  func.func @transform_1(%arg0: i32) -> (i32, i32) {
    %c0_i32 = arith.constant 0 : i32
    %c0_i32_0 = arith.constant 0 : i32
    %c0_i32_1 = arith.constant 0 : i32
    return %c0_i32, %c0_i32_0 : i32, i32
  }
  func.func @transform_2(%arg0: i32) -> (i32, i32) {
    %c0_i32 = arith.constant 0 : i32
    %c0_i32_0 = arith.constant 0 : i32
    %c0_i32_1 = arith.constant 0 : i32
    return %c0_i32, %c0_i32_0 : i32, i32
  }
  func.func @transform_3(%arg0: i32) -> (i32, i32) {
    %c0_i32 = arith.constant 0 : i32
    %c0_i32_0 = arith.constant 0 : i32
    return %arg0, %c0_i32 : i32, i32
  }
}

module attributes {stable_mosaic.version = 11 : i64} {
  func.func @_stage_kernel(%arg0: i32, %arg1: memref<4x32x288xbf16, #tpu.memory_space<vmem>>, %arg2: memref<288x128xbf16, #tpu.memory_space<vmem>>, %arg3: memref<1x128xf32, #tpu.memory_space<vmem>>, %arg4: memref<32x128xf32, #tpu.memory_space<vmem>>) attributes {dimension_semantics = [#tpu.dimension_semantics<parallel>], iteration_bounds = array<i64: 1>, scalar_prefetch = 0 : i64, scratch_operands = 0 : i64, tpu.core_type = #tpu.core_type<tc>, window_params = [{transform_indices = @transform_0, window_bounds = array<i64: 4, 32, 288>}, {pipeline_mode = #tpu.pipeline_mode<synchronous>, transform_indices = @transform_1, window_bounds = array<i64: 288, 128>}, {pipeline_mode = #tpu.pipeline_mode<synchronous>, transform_indices = @transform_2, window_bounds = array<i64: 1, 128>}, {transform_indices = @transform_3, window_bounds = array<i64: 32, 128>}]} {
    %c0 = arith.constant 0 : index
    %c0_0 = arith.constant 0 : index
    %0 = vector.load %arg2[%c0, %c0_0] : memref<288x128xbf16, #tpu.memory_space<vmem>>, vector<288x128xbf16>
    %c0_1 = arith.constant 0 : index
    %c0_2 = arith.constant 0 : index
    %1 = vector.load %arg3[%c0_1, %c0_2] : memref<1x128xf32, #tpu.memory_space<vmem>>, vector<1x128xf32>
    %c0_3 = arith.constant 0 : index
    %c0_4 = arith.constant 0 : index
    %c0_5 = arith.constant 0 : index
    %2 = vector.load %arg1[%c0_3, %c0_4, %c0_5] : memref<4x32x288xbf16, #tpu.memory_space<vmem>>, vector<1x32x288xbf16>
    %3 = vector.shape_cast %2 : vector<1x32x288xbf16> to vector<32x288xbf16>
    %cst = arith.constant dense<0.000000e+00> : vector<32x128xf32>
    %4 = tpu.matmul %3, %0, %cst {dimension_numbers = #tpu.dot_dimension_numbers<[1], [0], [0], [1], [0, 0, 1, 1], [], []>} : vector<32x288xbf16>, vector<288x128xbf16>, vector<32x128xf32> -> vector<32x128xf32>
    %5 = vector.broadcast %1 : vector<1x128xf32> to vector<32x128xf32>
    %6 = arith.addf %4, %5 : vector<32x128xf32>
    %cst_6 = arith.constant 0.000000e+00 : f32
    %7 = vector.broadcast %cst_6 : f32 to vector<32x128xf32>
    %8 = arith.maximumf %6, %7 : vector<32x128xf32>
    %c1 = arith.constant 1 : index
    %c0_7 = arith.constant 0 : index
    %c0_8 = arith.constant 0 : index
    %9 = vector.load %arg1[%c1, %c0_7, %c0_8] : memref<4x32x288xbf16, #tpu.memory_space<vmem>>, vector<1x32x288xbf16>
    %10 = vector.shape_cast %9 : vector<1x32x288xbf16> to vector<32x288xbf16>
    %cst_9 = arith.constant dense<0.000000e+00> : vector<32x128xf32>
    %11 = tpu.matmul %10, %0, %cst_9 {dimension_numbers = #tpu.dot_dimension_numbers<[1], [0], [0], [1], [0, 0, 1, 1], [], []>} : vector<32x288xbf16>, vector<288x128xbf16>, vector<32x128xf32> -> vector<32x128xf32>
    %12 = vector.broadcast %1 : vector<1x128xf32> to vector<32x128xf32>
    %13 = arith.addf %11, %12 : vector<32x128xf32>
    %cst_10 = arith.constant 0.000000e+00 : f32
    %14 = vector.broadcast %cst_10 : f32 to vector<32x128xf32>
    %15 = arith.maximumf %13, %14 : vector<32x128xf32>
    %16 = arith.maximumf %8, %15 : vector<32x128xf32>
    %c2 = arith.constant 2 : index
    %c0_11 = arith.constant 0 : index
    %c0_12 = arith.constant 0 : index
    %17 = vector.load %arg1[%c2, %c0_11, %c0_12] : memref<4x32x288xbf16, #tpu.memory_space<vmem>>, vector<1x32x288xbf16>
    %18 = vector.shape_cast %17 : vector<1x32x288xbf16> to vector<32x288xbf16>
    %cst_13 = arith.constant dense<0.000000e+00> : vector<32x128xf32>
    %19 = tpu.matmul %18, %0, %cst_13 {dimension_numbers = #tpu.dot_dimension_numbers<[1], [0], [0], [1], [0, 0, 1, 1], [], []>} : vector<32x288xbf16>, vector<288x128xbf16>, vector<32x128xf32> -> vector<32x128xf32>
    %20 = vector.broadcast %1 : vector<1x128xf32> to vector<32x128xf32>
    %21 = arith.addf %19, %20 : vector<32x128xf32>
    %cst_14 = arith.constant 0.000000e+00 : f32
    %22 = vector.broadcast %cst_14 : f32 to vector<32x128xf32>
    %23 = arith.maximumf %21, %22 : vector<32x128xf32>
    %c3 = arith.constant 3 : index
    %c0_15 = arith.constant 0 : index
    %c0_16 = arith.constant 0 : index
    %24 = vector.load %arg1[%c3, %c0_15, %c0_16] : memref<4x32x288xbf16, #tpu.memory_space<vmem>>, vector<1x32x288xbf16>
    %25 = vector.shape_cast %24 : vector<1x32x288xbf16> to vector<32x288xbf16>
    %cst_17 = arith.constant dense<0.000000e+00> : vector<32x128xf32>
    %26 = tpu.matmul %25, %0, %cst_17 {dimension_numbers = #tpu.dot_dimension_numbers<[1], [0], [0], [1], [0, 0, 1, 1], [], []>} : vector<32x288xbf16>, vector<288x128xbf16>, vector<32x128xf32> -> vector<32x128xf32>
    %27 = vector.broadcast %1 : vector<1x128xf32> to vector<32x128xf32>
    %28 = arith.addf %26, %27 : vector<32x128xf32>
    %cst_18 = arith.constant 0.000000e+00 : f32
    %29 = vector.broadcast %cst_18 : f32 to vector<32x128xf32>
    %30 = arith.maximumf %28, %29 : vector<32x128xf32>
    %31 = arith.maximumf %23, %30 : vector<32x128xf32>
    %32 = arith.maximumf %16, %31 : vector<32x128xf32>
    %c0_19 = arith.constant 0 : index
    %c0_20 = arith.constant 0 : index
    %33 = vector.load %arg4[%c0_19, %c0_20] : memref<32x128xf32, #tpu.memory_space<vmem>>, vector<32x128xf32>
    tpu.vector_store %arg4[%c0_19, %c0_20], %32 {strides = array<i32>} : memref<32x128xf32, #tpu.memory_space<vmem>>, vector<32x128xf32>,
    return
  }
  func.func @transform_0(%arg0: i32) -> (i32, i32, i32) {
    %c0_i32 = arith.constant 0 : i32
    %c0_i32_0 = arith.constant 0 : i32
    %c0_i32_1 = arith.constant 0 : i32
    return %c0_i32, %arg0, %c0_i32_0 : i32, i32, i32
  }
  func.func @transform_1(%arg0: i32) -> (i32, i32) {
    %c0_i32 = arith.constant 0 : i32
    %c0_i32_0 = arith.constant 0 : i32
    %c0_i32_1 = arith.constant 0 : i32
    return %c0_i32, %c0_i32_0 : i32, i32
  }
  func.func @transform_2(%arg0: i32) -> (i32, i32) {
    %c0_i32 = arith.constant 0 : i32
    %c0_i32_0 = arith.constant 0 : i32
    %c0_i32_1 = arith.constant 0 : i32
    return %c0_i32, %c0_i32_0 : i32, i32
  }
  func.func @transform_3(%arg0: i32) -> (i32, i32) {
    %c0_i32 = arith.constant 0 : i32
    %c0_i32_0 = arith.constant 0 : i32
    return %arg0, %c0_i32 : i32, i32
  }
}

module attributes {stable_mosaic.version = 11 : i64} {
  func.func @_stage_head_kernel(%arg0: i32, %arg1: memref<4x8x576xbf16, #tpu.memory_space<vmem>>, %arg2: memref<576x128xbf16, #tpu.memory_space<vmem>>, %arg3: memref<1x128xf32, #tpu.memory_space<vmem>>, %arg4: memref<128x128xbf16, #tpu.memory_space<vmem>>, %arg5: memref<1x128xf32, #tpu.memory_space<vmem>>, %arg6: memref<8x128xf32, #tpu.memory_space<vmem>>) attributes {dimension_semantics = [#tpu.dimension_semantics<parallel>], iteration_bounds = array<i64: 1>, scalar_prefetch = 0 : i64, scratch_operands = 0 : i64, tpu.core_type = #tpu.core_type<tc>, window_params = [{pipeline_mode = #tpu.pipeline_mode<synchronous>, transform_indices = @transform_0, window_bounds = array<i64: 4, 8, 576>}, {pipeline_mode = #tpu.pipeline_mode<synchronous>, transform_indices = @transform_1, window_bounds = array<i64: 576, 128>}, {pipeline_mode = #tpu.pipeline_mode<synchronous>, transform_indices = @transform_2, window_bounds = array<i64: 1, 128>}, {pipeline_mode = #tpu.pipeline_mode<synchronous>, transform_indices = @transform_3, window_bounds = array<i64: 128, 128>}, {pipeline_mode = #tpu.pipeline_mode<synchronous>, transform_indices = @transform_4, window_bounds = array<i64: 1, 128>}, {pipeline_mode = #tpu.pipeline_mode<synchronous>, transform_indices = @transform_5, window_bounds = array<i64: 8, 128>}]} {
    %c0 = arith.constant 0 : index
    %c0_0 = arith.constant 0 : index
    %0 = vector.load %arg2[%c0, %c0_0] : memref<576x128xbf16, #tpu.memory_space<vmem>>, vector<576x128xbf16>
    %c0_1 = arith.constant 0 : index
    %c0_2 = arith.constant 0 : index
    %1 = vector.load %arg3[%c0_1, %c0_2] : memref<1x128xf32, #tpu.memory_space<vmem>>, vector<1x128xf32>
    %c0_3 = arith.constant 0 : index
    %c0_4 = arith.constant 0 : index
    %c0_5 = arith.constant 0 : index
    %2 = vector.load %arg1[%c0_3, %c0_4, %c0_5] : memref<4x8x576xbf16, #tpu.memory_space<vmem>>, vector<1x8x576xbf16>
    %3 = vector.shape_cast %2 : vector<1x8x576xbf16> to vector<8x576xbf16>
    %cst = arith.constant dense<0.000000e+00> : vector<8x128xf32>
    %4 = tpu.matmul %3, %0, %cst {dimension_numbers = #tpu.dot_dimension_numbers<[1], [0], [0], [1], [0, 0, 1, 1], [], []>} : vector<8x576xbf16>, vector<576x128xbf16>, vector<8x128xf32> -> vector<8x128xf32>
    %5 = vector.broadcast %1 : vector<1x128xf32> to vector<8x128xf32>
    %6 = arith.addf %4, %5 : vector<8x128xf32>
    %cst_6 = arith.constant 0.000000e+00 : f32
    %7 = vector.broadcast %cst_6 : f32 to vector<8x128xf32>
    %8 = arith.maximumf %6, %7 : vector<8x128xf32>
    %c1 = arith.constant 1 : index
    %c0_7 = arith.constant 0 : index
    %c0_8 = arith.constant 0 : index
    %9 = vector.load %arg1[%c1, %c0_7, %c0_8] : memref<4x8x576xbf16, #tpu.memory_space<vmem>>, vector<1x8x576xbf16>
    %10 = vector.shape_cast %9 : vector<1x8x576xbf16> to vector<8x576xbf16>
    %cst_9 = arith.constant dense<0.000000e+00> : vector<8x128xf32>
    %11 = tpu.matmul %10, %0, %cst_9 {dimension_numbers = #tpu.dot_dimension_numbers<[1], [0], [0], [1], [0, 0, 1, 1], [], []>} : vector<8x576xbf16>, vector<576x128xbf16>, vector<8x128xf32> -> vector<8x128xf32>
    %12 = vector.broadcast %1 : vector<1x128xf32> to vector<8x128xf32>
    %13 = arith.addf %11, %12 : vector<8x128xf32>
    %cst_10 = arith.constant 0.000000e+00 : f32
    %14 = vector.broadcast %cst_10 : f32 to vector<8x128xf32>
    %15 = arith.maximumf %13, %14 : vector<8x128xf32>
    %16 = arith.maximumf %8, %15 : vector<8x128xf32>
    %c2 = arith.constant 2 : index
    %c0_11 = arith.constant 0 : index
    %c0_12 = arith.constant 0 : index
    %17 = vector.load %arg1[%c2, %c0_11, %c0_12] : memref<4x8x576xbf16, #tpu.memory_space<vmem>>, vector<1x8x576xbf16>
    %18 = vector.shape_cast %17 : vector<1x8x576xbf16> to vector<8x576xbf16>
    %cst_13 = arith.constant dense<0.000000e+00> : vector<8x128xf32>
    %19 = tpu.matmul %18, %0, %cst_13 {dimension_numbers = #tpu.dot_dimension_numbers<[1], [0], [0], [1], [0, 0, 1, 1], [], []>} : vector<8x576xbf16>, vector<576x128xbf16>, vector<8x128xf32> -> vector<8x128xf32>
    %20 = vector.broadcast %1 : vector<1x128xf32> to vector<8x128xf32>
    %21 = arith.addf %19, %20 : vector<8x128xf32>
    %cst_14 = arith.constant 0.000000e+00 : f32
    %22 = vector.broadcast %cst_14 : f32 to vector<8x128xf32>
    %23 = arith.maximumf %21, %22 : vector<8x128xf32>
    %c3 = arith.constant 3 : index
    %c0_15 = arith.constant 0 : index
    %c0_16 = arith.constant 0 : index
    %24 = vector.load %arg1[%c3, %c0_15, %c0_16] : memref<4x8x576xbf16, #tpu.memory_space<vmem>>, vector<1x8x576xbf16>
    %25 = vector.shape_cast %24 : vector<1x8x576xbf16> to vector<8x576xbf16>
    %cst_17 = arith.constant dense<0.000000e+00> : vector<8x128xf32>
    %26 = tpu.matmul %25, %0, %cst_17 {dimension_numbers = #tpu.dot_dimension_numbers<[1], [0], [0], [1], [0, 0, 1, 1], [], []>} : vector<8x576xbf16>, vector<576x128xbf16>, vector<8x128xf32> -> vector<8x128xf32>
    %27 = vector.broadcast %1 : vector<1x128xf32> to vector<8x128xf32>
    %28 = arith.addf %26, %27 : vector<8x128xf32>
    %cst_18 = arith.constant 0.000000e+00 : f32
    %29 = vector.broadcast %cst_18 : f32 to vector<8x128xf32>
    %30 = arith.maximumf %28, %29 : vector<8x128xf32>
    %31 = arith.maximumf %23, %30 : vector<8x128xf32>
    %32 = arith.maximumf %16, %31 : vector<8x128xf32>
    %33 = arith.truncf %32 : vector<8x128xf32> to vector<8x128xbf16>
    %c0_19 = arith.constant 0 : index
    %c0_20 = arith.constant 0 : index
    %34 = vector.load %arg4[%c0_19, %c0_20] : memref<128x128xbf16, #tpu.memory_space<vmem>>, vector<128x128xbf16>
    %cst_21 = arith.constant dense<0.000000e+00> : vector<8x128xf32>
    %35 = tpu.matmul %33, %34, %cst_21 {dimension_numbers = #tpu.dot_dimension_numbers<[1], [0], [0], [1], [0, 0, 1, 1], [], []>} : vector<8x128xbf16>, vector<128x128xbf16>, vector<8x128xf32> -> vector<8x128xf32>
    %c0_22 = arith.constant 0 : index
    %c0_23 = arith.constant 0 : index
    %36 = vector.load %arg5[%c0_22, %c0_23] : memref<1x128xf32, #tpu.memory_space<vmem>>, vector<1x128xf32>
    %37 = vector.broadcast %36 : vector<1x128xf32> to vector<8x128xf32>
    %38 = arith.addf %35, %37 : vector<8x128xf32>
    %c0_24 = arith.constant 0 : index
    %c0_25 = arith.constant 0 : index
    %39 = vector.load %arg6[%c0_24, %c0_25] : memref<8x128xf32, #tpu.memory_space<vmem>>, vector<8x128xf32>
    tpu.vector_store %arg6[%c0_24, %c0_25], %38 {strides = array<i32>} : memref<8x128xf32, #tpu.memory_space<vmem>>, vector<8x128xf32>,
    return
  }
  func.func @transform_0(%arg0: i32) -> (i32, i32, i32) {
    %c0_i32 = arith.constant 0 : i32
    %c0_i32_0 = arith.constant 0 : i32
    %c0_i32_1 = arith.constant 0 : i32
    %c0_i32_2 = arith.constant 0 : i32
    return %c0_i32, %c0_i32_0, %c0_i32_1 : i32, i32, i32
  }
  func.func @transform_1(%arg0: i32) -> (i32, i32) {
    %c0_i32 = arith.constant 0 : i32
    %c0_i32_0 = arith.constant 0 : i32
    %c0_i32_1 = arith.constant 0 : i32
    return %c0_i32, %c0_i32_0 : i32, i32
  }
  func.func @transform_2(%arg0: i32) -> (i32, i32) {
    %c0_i32 = arith.constant 0 : i32
    %c0_i32_0 = arith.constant 0 : i32
    %c0_i32_1 = arith.constant 0 : i32
    return %c0_i32, %c0_i32_0 : i32, i32
  }
  func.func @transform_3(%arg0: i32) -> (i32, i32) {
    %c0_i32 = arith.constant 0 : i32
    %c0_i32_0 = arith.constant 0 : i32
    %c0_i32_1 = arith.constant 0 : i32
    return %c0_i32, %c0_i32_0 : i32, i32
  }
  func.func @transform_4(%arg0: i32) -> (i32, i32) {
    %c0_i32 = arith.constant 0 : i32
    %c0_i32_0 = arith.constant 0 : i32
    %c0_i32_1 = arith.constant 0 : i32
    return %c0_i32, %c0_i32_0 : i32, i32
  }
  func.func @transform_5(%arg0: i32) -> (i32, i32) {
    %c0_i32 = arith.constant 0 : i32
    %c0_i32_0 = arith.constant 0 : i32
    %c0_i32_1 = arith.constant 0 : i32
    return %c0_i32, %c0_i32_0 : i32, i32
  }
}

</mosaic_0001>

<llo_original>
// kernel: yolo_forward.3
$region0: #{yolo_forward.3}
  #allocation0 [shape = 'u32[]', space=smem, size = 0x4, offset = 0x4, fixed_abs, tag = 'smem constant byte address 0x4 - core index']
  #allocation1 [shape = 'u32[144,128]{1,0:T(1,128)}', space=vmem, size = 0x12000, scoped, tag = 'internal scratch']
  %s0 = inlined_call_operand.vmem [shape: bf16[4,128,27], index: 0, kind: input, shape index: {}]
  %s1 = inlined_call_operand.vmem [shape: bf16[27,128], index: 1, kind: input, shape index: {}]
  %s2 = inlined_call_operand.vmem [shape: f32[1,128], index: 2, kind: input, shape index: {}]
  %s3 = inlined_call_operand.vmem [shape: f32[128,128], index: 3, kind: output, shape index: {}]
  %s4 = sld [smem:[#allocation0]]
  $region86: #{yolo_forward.3} parent=0
    _
  %s6 = ssub.s32 1, %s4
  %s7 = scalar_select 0, %s6, %s4
  $region1: #{yolo_forward.3} parent=0
    #allocation2 [shape = 'u8[131072]{0}', space=vmem, size = 0x20000, scoped, tag = 'input window, operand 0']
    loop: start=0, step=1, limit=4
    $region2: #{yolo_forward.3} parent=1 // loop_pre_header
      _
    $region3: #{yolo_forward.3} parent=1 // loop_header
      %s9 = sphi 0, %s13
      %p10 = scmp.ge.s32.totalorder %s9, 4
      %s19 = sphi 0, %s21
      %s22 = sphi 0, %s19
      %s23 = sphi 0, %s22
      %s39 = sphi 0, %s23
      %s43 = sphi 0, %s43
      %s45 = sphi 0, %s43
      %s46 = sphi 0, %s45
      %s60 = sphi 0, %s46
      %s64 = sphi 0, %s64
      %s66 = sphi 0, %s64
      %s67 = sphi 0, %s66
      %s81 = sphi 0, %s67
      %s87 = sphi 0, %s89
      %s90 = sphi 0, %s87
      %s91 = sphi 0, %s90
      %s107 = sphi 0, %s91
    $region4: #{yolo_forward.3} parent=1 // loop_header_branch
      %12 = sbr.rel (%p10) target = $region8
    $region5: #{yolo_forward.3} parent=1 // loop_body
      %s14 = ssub.s32 %s9, 1
      %s15 = ssub.s32 %s9, 2
      %s16 = sadd.s32 %s9, 1
      %s17 = ssub.s32 %s9, %s16
      %p18 = scmp.eq.s32.totalorder %s17, 0
      %s20 = sadd.s32 %s19, 1
      %s21 = scalar_select %p18, %s19, %s20
      %p24 = pneg %p18
      %p25 = scmp.eq.s32.totalorder %s9, 1
      %p26 = por %p24, %p25
      %p27 = scmp.ne.s32.totalorder %s19, %s22
      %p28 = scmp.eq.s32.totalorder %s9, 0
      %p29 = por %p27, %p28
      %p30 = scmp.ne.s32.totalorder %s19, %s22
      %p31 = scmp.eq.s32.totalorder %s14, 1
      %p32 = por %p30, %p31
      %p33 = scmp.ne.s32.totalorder %s22, %s23
      %p34 = scmp.eq.s32.totalorder %s14, 0
      %p35 = por %p33, %p34
      %p36 = scmp.ne.s32.totalorder %s22, %s23
      %p37 = scmp.eq.s32.totalorder %s15, 1
      %p38 = por %p36, %p37
      %p40 = scmp.ne.s32.totalorder %s23, %s39
      %p41 = scmp.eq.s32.totalorder %s15, 0
      %p42 = por %p40, %p41
      %s44 = sadd.s32 %s43, 1
      %p47 = scmp.eq.s32.totalorder %s9, 1
      %p48 = scmp.ne.s32.totalorder %s43, %s45
      %p49 = scmp.eq.s32.totalorder %s9, 0
      %p50 = por %p48, %p49
      %p51 = scmp.ne.s32.totalorder %s43, %s45
      %p52 = scmp.eq.s32.totalorder %s14, 1
      %p53 = por %p51, %p52
      %p54 = scmp.ne.s32.totalorder %s45, %s46
      %p55 = scmp.eq.s32.totalorder %s14, 0
      %p56 = por %p54, %p55
      %p57 = scmp.ne.s32.totalorder %s45, %s46
      %p58 = scmp.eq.s32.totalorder %s15, 1
      %p59 = por %p57, %p58
      %p61 = scmp.ne.s32.totalorder %s46, %s60
      %p62 = scmp.eq.s32.totalorder %s15, 0
      %p63 = por %p61, %p62
      %s65 = sadd.s32 %s64, 1
      %p68 = scmp.eq.s32.totalorder %s9, 1
      %p69 = scmp.ne.s32.totalorder %s64, %s66
      %p70 = scmp.eq.s32.totalorder %s9, 0
      %p71 = por %p69, %p70
      %p72 = scmp.ne.s32.totalorder %s64, %s66
      %p73 = scmp.eq.s32.totalorder %s14, 1
      %p74 = por %p72, %p73
      %p75 = scmp.ne.s32.totalorder %s66, %s67
      %p76 = scmp.eq.s32.totalorder %s14, 0
      %p77 = por %p75, %p76
      %p78 = scmp.ne.s32.totalorder %s66, %s67
      %p79 = scmp.eq.s32.totalorder %s15, 1
      %p80 = por %p78, %p79
      %p82 = scmp.ne.s32.totalorder %s67, %s81
      %p83 = scmp.eq.s32.totalorder %s15, 0
      %p84 = por %p82, %p83
      %s85 = ssub.s32 %s9, %s16
      %p86 = scmp.eq.s32.totalorder %s85, 0
      %s88 = sadd.s32 %s87, 1
      %s89 = scalar_select %p86, %s87, %s88
      %p92 = pneg %p86
      %p93 = scmp.eq.s32.totalorder %s9, 1
      %p94 = por %p92, %p93
      %p95 = scmp.ne.s32.totalorder %s87, %s90
      %p96 = scmp.eq.s32.totalorder %s9, 0
      %p97 = por %p95, %p96
      %p98 = scmp.ne.s32.totalorder %s87, %s90
      %p99 = scmp.eq.s32.totalorder %s14, 1
      %p100 = por %p98, %p99
      %p101 = scmp.ne.s32.totalorder %s90, %s91
      %p102 = scmp.eq.s32.totalorder %s14, 0
      %p103 = por %p101, %p102
      %p104 = scmp.ne.s32.totalorder %s90, %s91
      %p105 = scmp.eq.s32.totalorder %s15, 1
      %p106 = por %p104, %p105
      %p108 = scmp.ne.s32.totalorder %s91, %s107
      %p109 = scmp.eq.s32.totalorder %s15, 0
      %p110 = por %p108, %p109
      %p111 = scmp.le.s32.totalorder 1, %s9
      %p112 = scmp.lt.s32.totalorder %s9, 3
      %p113 = pnand %p111, %p112
      %p114 = pneg %p113
      // Predicated region
      $region9: #{yolo_forward.3} parent=5 // pred_check
        _
      $region10: #{yolo_forward.3} parent=5 // pred_check_branch
        %116 = sbr.rel (%p113) target = $region12
      $region11: #{yolo_forward.3} parent=5 // pred_region
        %s117 = ssub.s32 %s9, 1
        // Predicated region
        $region13: #{yolo_forward.3} parent=11 // pred_check
          %p118 = pneg %p56
        $region14: #{yolo_forward.3} parent=11 // pred_check_branch
          %120 = sbr.rel (%p118) target = $region16
        $region15: #{yolo_forward.3} parent=11 // pred_region
          _
        $region16: #{yolo_forward.3} parent=11 // pred_fallthru
          _
        // Predicated region
        $region17: #{yolo_forward.3} parent=11 // pred_check
          %p121 = pneg %p77
        $region18: #{yolo_forward.3} parent=11 // pred_check_branch
          %123 = sbr.rel (%p121) target = $region20
        $region19: #{yolo_forward.3} parent=11 // pred_region
          _
        $region20: #{yolo_forward.3} parent=11 // pred_fallthru
          _
      $region12: #{yolo_forward.3} parent=5 // pred_fallthru
        _
      %p124 = scmp.lt.s32.totalorder %s9, 2
      // Predicated region
      $region21: #{yolo_forward.3} parent=5 // pred_check
        %p125 = pneg %p124
      $region22: #{yolo_forward.3} parent=5 // pred_check_branch
        %127 = sbr.rel (%p125) target = $region24
      $region23: #{yolo_forward.3} parent=5 // pred_region
        // Predicated region
        $region25: #{yolo_forward.3} parent=23 // pred_check
          %p128 = pneg %p29
        $region26: #{yolo_forward.3} parent=23 // pred_check_branch
          %130 = sbr.rel (%p128) target = $region28
        $region27: #{yolo_forward.3} parent=23 // pred_region
          %s131 = sand.u32 %s19, 1
          %s132 = sand.u32 %s19, 1
          %s133 = smul.addr %s132, 128
          %s134 = scalar_lea.vmem [#allocation2], %s133
          %s135 = smul.u32 8, %s9
          %s136 = smul.addr %s135, 4
          %s137 = scalar_lea.vmem %s0, %s136
          // Predicated region
          $region29: #{yolo_forward.3} parent=27 // pred_check
            _
          $region30: #{yolo_forward.3} parent=27 // pred_check_branch
            %139 = sbr.rel (0) target = $region32
          $region31: #{yolo_forward.3} parent=27 // pred_region
            // Predicated region
            $region33: #{yolo_forward.3} parent=31 // pred_check
              _
            $region34: #{yolo_forward.3} parent=31 // pred_check_branch
              %141 = sbr.rel target = $region36
            $region35: #{yolo_forward.3} parent=31 // pred_region
              // Predicated region
              $region48: #{yolo_forward.3} parent=35 // pred_check
                _
              $region49: #{yolo_forward.3} parent=35 // pred_check_branch
                %218 = sbr.rel (0) target = $region51
              $region50: #{yolo_forward.3} parent=35 // pred_region
                loop: start=0, step=1, limit=1
                $region52: #{yolo_forward.3} parent=50 // loop_pre_header
                  _
                $region53: #{yolo_forward.3} parent=50 // loop_header
                  %s220 = sphi 0, %s224
                  %p221 = scmp.ge.s32.totalorder %s220, 1
                  %s225 = sphi %s137, %s137
                  %s226 = sphi %s134, %s134
                $region54: #{yolo_forward.3} parent=50 // loop_header_branch
                  %223 = sbr.rel (%p221) target = $region58
                $region55: #{yolo_forward.3} parent=50 // loop_body
                  _
                $region56: #{yolo_forward.3} parent=50 // loop_footer
                  %s224 = sadd.s32 1, %s220
                $region57: #{yolo_forward.3} parent=50 // loop_footer_branch
                  %219 = sbr.rel target = $region53
                $region58: #{yolo_forward.3} parent=50 // loop_exit
                  _
                loop: start=0, step=1, limit=1
                $region59: #{yolo_forward.3} parent=50 // loop_pre_header
                  _
                $region60: #{yolo_forward.3} parent=50 // loop_header
                  %s229 = sphi 0, %s233
                  %p230 = scmp.ge.s32.totalorder %s229, 1
                  %s234 = sphi %s137, %s137
                  %s235 = sphi %s134, %s134
                $region61: #{yolo_forward.3} parent=50 // loop_header_branch
                  %232 = sbr.rel (%p230) target = $region65
                $region62: #{yolo_forward.3} parent=50 // loop_body
                  %v236 = vld [vmem:[%s234] sm:$0xf]
                  %237 = vst [vmem:[%s235] sm:$0xf] %v236
                  %v238 = vld [vmem:[%s234 + $0x4] sm:$0xf]
                  %239 = vst [vmem:[%s235 + $0x4] sm:$0xf] %v238
                  %v240 = vld [vmem:[%s234 + $0x8] sm:$0xf]
                  %241 = vst [vmem:[%s235 + $0x8] sm:$0xf] %v240
                  %v242 = vld [vmem:[%s234 + $0xc] sm:$0xf]
                  %243 = vst [vmem:[%s235 + $0xc] sm:$0xf] %v242
                  %v244 = vld [vmem:[%s234 + $0x10] sm:$0xf]
                  %245 = vst [vmem:[%s235 + $0x10] sm:$0xf] %v244
                  %v246 = vld [vmem:[%s234 + $0x14] sm:$0xf]
                  %247 = vst [vmem:[%s235 + $0x14] sm:$0xf] %v246
                  %v248 = vld [vmem:[%s234 + $0x18] sm:$0xf]
                  %249 = vst [vmem:[%s235 + $0x18] sm:$0xf] %v248
                  %v250 = vld [vmem:[%s234 + $0x1c] sm:$0xf]
                  %251 = vst [vmem:[%s235 + $0x1c] sm:$0xf] %v250
                  %v252 = vld [vmem:[%s234 + $0x40] sm:$0xf]
                  %253 = vst [vmem:[%s235 + $0x20] sm:$0xf] %v252
                  %v254 = vld [vmem:[%s234 + $0x44] sm:$0xf]
                  %255 = vst [vmem:[%s235 + $0x24] sm:$0xf] %v254
                  %v256 = vld [vmem:[%s234 + $0x48] sm:$0xf]
                  %257 = vst [vmem:[%s235 + $0x28] sm:$0xf] %v256
                  %v258 = vld [vmem:[%s234 + $0x4c] sm:$0xf]
                  %259 = vst [vmem:[%s235 + $0x2c] sm:$0xf] %v258
                  %v260 = vld [vmem:[%s234 + $0x50] sm:$0xf]
                  %261 = vst [vmem:[%s235 + $0x30] sm:$0xf] %v260
                  %v262 = vld [vmem:[%s234 + $0x54] sm:$0xf]
                  %263 = vst [vmem:[%s235 + $0x34] sm:$0xf] %v262
                  %v264 = vld [vmem:[%s234 + $0x58] sm:$0xf]
                  %265 = vst [vmem:[%s235 + $0x38] sm:$0xf] %v264
                  %v266 = vld [vmem:[%s234 + $0x5c] sm:$0xf]
                  %267 = vst [vmem:[%s235 + $0x3c] sm:$0xf] %v266
                  %v268 = vld [vmem:[%s234 + $0x80] sm:$0xf]
                  %269 = vst [vmem:[%s235 + $0x40] sm:$0xf] %v268
                  %v270 = vld [vmem:[%s234 + $0x84] sm:$0xf]
                  %271 = vst [vmem:[%s235 + $0x44] sm:$0xf] %v270
                  %v272 = vld [vmem:[%s234 + $0x88] sm:$0xf]
                  %273 = vst [vmem:[%s235 + $0x48] sm:$0xf] %v272
                  %v274 = vld [vmem:[%s234 + $0x8c] sm:$0xf]
                  %275 = vst [vmem:[%s235 + $0x4c] sm:$0xf] %v274
                  %v276 = vld [vmem:[%s234 + $0x90] sm:$0xf]
                  %277 = vst [vmem:[%s235 + $0x50] sm:$0xf] %v276
                  %v278 = vld [vmem:[%s234 + $0x94] sm:$0xf]
                  %279 = vst [vmem:[%s235 + $0x54] sm:$0xf] %v278
                  %v280 = vld [vmem:[%s234 + $0x98] sm:$0xf]
                  %281 = vst [vmem:[%s235 + $0x58] sm:$0xf] %v280
                  %v282 = vld [vmem:[%s234 + $0x9c] sm:$0xf]
                  %283 = vst [vmem:[%s235 + $0x5c] sm:$0xf] %v282
                  %v284 = vld [vmem:[%s234 + $0xc0] sm:$0xf]
                  %285 = vst [vmem:[%s235 + $0x60] sm:$0xf] %v284
                  %v286 = vld [vmem:[%s234 + $0xc4] sm:$0xf]
                  %287 = vst [vmem:[%s235 + $0x64] sm:$0xf] %v286
                  %v288 = vld [vmem:[%s234 + $0xc8] sm:$0xf]
                  %289 = vst [vmem:[%s235 + $0x68] sm:$0xf] %v288
                  %v290 = vld [vmem:[%s234 + $0xcc] sm:$0xf]
                  %291 = vst [vmem:[%s235 + $0x6c] sm:$0xf] %v290
                  %v292 = vld [vmem:[%s234 + $0xd0] sm:$0xf]
                  %293 = vst [vmem:[%s235 + $0x70] sm:$0xf] %v292
                  %v294 = vld [vmem:[%s234 + $0xd4] sm:$0xf]
                  %295 = vst [vmem:[%s235 + $0x74] sm:$0xf] %v294
                  %v296 = vld [vmem:[%s234 + $0xd8] sm:$0xf]
                  %297 = vst [vmem:[%s235 + $0x78] sm:$0xf] %v296
                  %v298 = vld [vmem:[%s234 + $0xdc] sm:$0xf]
                  %299 = vst [vmem:[%s235 + $0x7c] sm:$0xf] %v298
                $region63: #{yolo_forward.3} parent=50 // loop_footer
                  %s233 = sadd.s32 1, %s229
                $region64: #{yolo_forward.3} parent=50 // loop_footer_branch
                  %228 = sbr.rel target = $region60
                $region65: #{yolo_forward.3} parent=50 // loop_exit
                  _
              $region51: #{yolo_forward.3} parent=35 // pred_fallthru
                _
            $region36: #{yolo_forward.3} parent=31 // pred_fallthru
              _
            // Predicated region
            $region37: #{yolo_forward.3} parent=31 // pred_check
              _
            $region38: #{yolo_forward.3} parent=31 // pred_check_branch
              %143 = sbr.rel (0) target = $region40
            $region39: #{yolo_forward.3} parent=31 // pred_region
              loop: start=0, step=1, limit=1
              $region41: #{yolo_forward.3} parent=39 // loop_pre_header
                _
              $region42: #{yolo_forward.3} parent=39 // loop_header
                %s146 = sphi 0, %s150
                %p147 = scmp.ge.s32.totalorder %s146, 1
                %s151 = sphi %s137, %s137
                %s152 = sphi %s134, %s134
              $region43: #{yolo_forward.3} parent=39 // loop_header_branch
                %149 = sbr.rel (%p147) target = $region47
              $region44: #{yolo_forward.3} parent=39 // loop_body
                %v153 = vld [vmem:[%s151] sm:$0xf]
                %154 = vst [vmem:[%s152] sm:$0xf] %v153
                %v155 = vld [vmem:[%s151 + $0x4] sm:$0xf]
                %156 = vst [vmem:[%s152 + $0x4] sm:$0xf] %v155
                %v157 = vld [vmem:[%s151 + $0x8] sm:$0xf]
                %158 = vst [vmem:[%s152 + $0x8] sm:$0xf] %v157
                %v159 = vld [vmem:[%s151 + $0xc] sm:$0xf]
                %160 = vst [vmem:[%s152 + $0xc] sm:$0xf] %v159
                %v161 = vld [vmem:[%s151 + $0x10] sm:$0xf]
                %162 = vst [vmem:[%s152 + $0x10] sm:$0xf] %v161
                %v163 = vld [vmem:[%s151 + $0x14] sm:$0xf]
                %164 = vst [vmem:[%s152 + $0x14] sm:$0xf] %v163
                %v165 = vld [vmem:[%s151 + $0x18] sm:$0xf]
                %166 = vst [vmem:[%s152 + $0x18] sm:$0xf] %v165
                %v167 = vld [vmem:[%s151 + $0x1c] sm:$0xf]
                %168 = vst [vmem:[%s152 + $0x1c] sm:$0xf] %v167
                %v169 = vld [vmem:[%s151 + $0x40] sm:$0xf]
                %170 = vst [vmem:[%s152 + $0x20] sm:$0xf] %v169
                %v171 = vld [vmem:[%s151 + $0x44] sm:$0xf]
                %172 = vst [vmem:[%s152 + $0x24] sm:$0xf] %v171
                %v173 = vld [vmem:[%s151 + $0x48] sm:$0xf]
                %174 = vst [vmem:[%s152 + $0x28] sm:$0xf] %v173
                %v175 = vld [vmem:[%s151 + $0x4c] sm:$0xf]
                %176 = vst [vmem:[%s152 + $0x2c] sm:$0xf] %v175
                %v177 = vld [vmem:[%s151 + $0x50] sm:$0xf]
                %178 = vst [vmem:[%s152 + $0x30] sm:$0xf] %v177
                %v179 = vld [vmem:[%s151 + $0x54] sm:$0xf]
                %180 = vst [vmem:[%s152 + $0x34] sm:$0xf] %v179
                %v181 = vld [vmem:[%s151 + $0x58] sm:$0xf]
                %182 = vst [vmem:[%s152 + $0x38] sm:$0xf] %v181
                %v183 = vld [vmem:[%s151 + $0x5c] sm:$0xf]
                %184 = vst [vmem:[%s152 + $0x3c] sm:$0xf] %v183
                %v185 = vld [vmem:[%s151 + $0x80] sm:$0xf]
                %186 = vst [vmem:[%s152 + $0x40] sm:$0xf] %v185
                %v187 = vld [vmem:[%s151 + $0x84] sm:$0xf]
                %188 = vst [vmem:[%s152 + $0x44] sm:$0xf] %v187
                %v189 = vld [vmem:[%s151 + $0x88] sm:$0xf]
                %190 = vst [vmem:[%s152 + $0x48] sm:$0xf] %v189
                %v191 = vld [vmem:[%s151 + $0x8c] sm:$0xf]
                %192 = vst [vmem:[%s152 + $0x4c] sm:$0xf] %v191
                %v193 = vld [vmem:[%s151 + $0x90] sm:$0xf]
                %194 = vst [vmem:[%s152 + $0x50] sm:$0xf] %v193
                %v195 = vld [vmem:[%s151 + $0x94] sm:$0xf]
                %196 = vst [vmem:[%s152 + $0x54] sm:$0xf] %v195
                %v197 = vld [vmem:[%s151 + $0x98] sm:$0xf]
                %198 = vst [vmem:[%s152 + $0x58] sm:$0xf] %v197
                %v199 = vld [vmem:[%s151 + $0x9c] sm:$0xf]
                %200 = vst [vmem:[%s152 + $0x5c] sm:$0xf] %v199
                %v201 = vld [vmem:[%s151 + $0xc0] sm:$0xf]
                %202 = vst [vmem:[%s152 + $0x60] sm:$0xf] %v201
                %v203 = vld [vmem:[%s151 + $0xc4] sm:$0xf]
                %204 = vst [vmem:[%s152 + $0x64] sm:$0xf] %v203
                %v205 = vld [vmem:[%s151 + $0xc8] sm:$0xf]
                %206 = vst [vmem:[%s152 + $0x68] sm:$0xf] %v205
                %v207 = vld [vmem:[%s151 + $0xcc] sm:$0xf]
                %208 = vst [vmem:[%s152 + $0x6c] sm:$0xf] %v207
                %v209 = vld [vmem:[%s151 + $0xd0] sm:$0xf]
                %210 = vst [vmem:[%s152 + $0x70] sm:$0xf] %v209
                %v211 = vld [vmem:[%s151 + $0xd4] sm:$0xf]
                %212 = vst [vmem:[%s152 + $0x74] sm:$0xf] %v211
                %v213 = vld [vmem:[%s151 + $0xd8] sm:$0xf]
                %214 = vst [vmem:[%s152 + $0x78] sm:$0xf] %v213
                %v215 = vld [vmem:[%s151 + $0xdc] sm:$0xf]
                %216 = vst [vmem:[%s152 + $0x7c] sm:$0xf] %v215
              $region45: #{yolo_forward.3} parent=39 // loop_footer
                %s150 = sadd.s32 1, %s146
              $region46: #{yolo_forward.3} parent=39 // loop_footer_branch
                %145 = sbr.rel target = $region42
              $region47: #{yolo_forward.3} parent=39 // loop_exit
                _
            $region40: #{yolo_forward.3} parent=31 // pred_fallthru
              _
          $region32: #{yolo_forward.3} parent=27 // pred_fallthru
            _
          %300 = vnop
        $region28: #{yolo_forward.3} parent=23 // pred_fallthru
          _
      $region24: #{yolo_forward.3} parent=5 // pred_fallthru
        _
      %p301 = scmp.le.s32.totalorder 1, %s9
      %p302 = scmp.lt.s32.totalorder %s9, 3
      %p303 = pnand %p301, %p302
      %p304 = pneg %p303
      // Predicated region
      $region66: #{yolo_forward.3} parent=5 // pred_check
        _
      $region67: #{yolo_forward.3} parent=5 // pred_check_branch
        %306 = sbr.rel (%p303) target = $region69
      $region68: #{yolo_forward.3} parent=5 // pred_region
        %s307 = ssub.s32 %s9, 1
        %s308 = sand.u32 %s22, 1
        %s309 = sand.u32 %s22, 1
        %s310 = smul.addr %s309, 128
        %s311 = scalar_lea.vmem [#allocation2], %s310
        // Predicated region
        $region70: #{yolo_forward.3} parent=68 // pred_check
          %p312 = pneg %p35
        $region71: #{yolo_forward.3} parent=68 // pred_check_branch
          %314 = sbr.rel (%p312) target = $region73
        $region72: #{yolo_forward.3} parent=68 // pred_region
          _
        $region73: #{yolo_forward.3} parent=68 // pred_fallthru
          _
        %s315 = sand.u32 %s22, 1
        %s316 = sand.u32 %s22, 1
        %s317 = smul.addr %s316, 128
        %s318 = scalar_lea.vmem [#allocation2], %s317
        %p319 = pneg %p35
        %p320 = pneg %p32
        %p321 = pneg %p56
        %p322 = pneg %p53
        %p323 = pneg %p77
        %p324 = pneg %p74
        %p325 = pneg %p103
        %p326 = pneg %p100
        %s327 = smul.u32 8, %s14
        %p328 = scmp.lt.s32.totalorder %s327, 15
        %s329 = scalar_select %p328, %s327, 15
        %s330 = smul.addr %s329, 8
        %s331 = scalar_lea.vmem %s3, %s330
        %s332 = smul.u32 8, %s14
        %s333 = smul.u32 8, %s14
        %p334 = scmp.lt.s32.totalorder %s333, 15
        %s335 = scalar_select %p334, %s333, 15
        %s336 = smul.addr %s335, 8
        %s337 = scalar_lea.vmem %s3, %s336
        %s338 = smul.u32 8, %s14
        %v340 = vld [vmem:[%s1] sm:$0xf]
        %v341 = vld [vmem:[%s1 + $0x4] sm:$0xf]
        %v342 = vld [vmem:[%s1 + $0x8] sm:$0xf]
        %v343 = vld [vmem:[%s1 + $0xc] sm:$0x3]
        %v344 = vld [vmem:[%s2] sm:$0x1]
        %v345 = vld [vmem:[%s311] sm:$0xf]
        %v346 = vld [vmem:[%s311 + $0x4] sm:$0xf]
        %v347 = vld [vmem:[%s311 + $0x8] sm:$0xf]
        %v348 = vld [vmem:[%s311 + $0xc] sm:$0xf]
        %v349 = vld [vmem:[%s311 + $0x10] sm:$0xf]
        %v350 = vld [vmem:[%s311 + $0x14] sm:$0xf]
        %v351 = vld [vmem:[%s311 + $0x18] sm:$0xf]
        %v352 = vld [vmem:[%s311 + $0x1c] sm:$0xf]
        %v354 = vlaneseq
        %v355 = vshrl.u32 %v354, 7
        %v356 = vsub.s32 0, %v355
        %v357 = vrot.slane %v344, %v356
        %v367 = vunpack.c.l.b16 %v345
        %v368 = vunpack.c.l.b16 %v346
        %v369 = vunpack.c.l.b16 %v347
        %v370 = vunpack.c.l.b16 %v348
        %v371 = vunpack.c.l.b16 %v349
        %v372 = vunpack.c.l.b16 %v350
        %v373 = vunpack.c.l.b16 %v351
        %v374 = vunpack.c.l.b16 %v352
        %v375 = vpack.c.b16 %v368, %v367
        %v376 = vpack.c.b16 %v370, %v369
        %v377 = vpack.c.b16 %v372, %v371
        %v378 = vpack.c.b16 %v374, %v373
        %v383 = vunpack.c.l.b16 %v340
        %v384 = vunpack.c.l.b16 %v341
        %v385 = vunpack.c.l.b16 %v342
        %v386 = vunpack.c.l.b16 %v343
        %v387 = vpack.c.b16 %v384, %v383
        %v388 = vpack.c.b16 %v386, %v385
        %vm390 = vcmask 220160
        %v392 = vsel %vm390, %v375, 0
        %v395 = vsel %vm390, %v376, 0
        %v398 = vsel %vm390, %v377, 0
        %v401 = vsel %vm390, %v378, 0
        %vm403 = vcmask 1044480
        %vm404 = vcmask 1045504
        %v405 = vsel %vm403, 4294967295, 65535
        %v406 = vsel %vm404, %v405, 0
        %v408 = vand.u32 %v388, %v406
        %410 = vmatprep.subr.bf16.mxu0 0
        %411 = vmatpush1.bf16.msra.mxu0 %v387
        %412 = vmatprep.subr.bf16.mxu0 0
        %413 = vmatpush1.bf16.msra.mxu0 %v408
        %414 = vmatprep.subr.bf16.mxu0 0
        %415 = vmatpush1.bf16.msra.mxu0 0
        %416 = vmatprep.subr.bf16.mxu0 0
        %417 = vmatpush1.bf16.msra.mxu0 0
        %418 = vmatprep.subr.bf16.mxu0 0
        %419 = vmatpush1.bf16.msra.mxu0 0
        %420 = vmatprep.subr.bf16.mxu0 0
        %421 = vmatpush1.bf16.msra.mxu0 0
        %422 = vmatprep.subr.bf16.mxu0 0
        %423 = vmatpush1.bf16.msra.mxu0 0
        %424 = vmatprep.subr.bf16.mxu0 0
        %425 = vmatpush1.bf16.msra.mxu0 0
        %426 = vmatprep.subr.bf16.mxu0 0
        %427 = vmatpush1.bf16.msra.mxu0 0
        %428 = vmatprep.subr.bf16.mxu0 0
        %429 = vmatpush1.bf16.msra.mxu0 0
        %430 = vmatprep.subr.bf16.mxu0 0
        %431 = vmatpush1.bf16.msra.mxu0 0
        %432 = vmatprep.subr.bf16.mxu0 0
        %433 = vmatpush1.bf16.msra.mxu0 0
        %434 = vmatprep.subr.bf16.mxu0 0
        %435 = vmatpush1.bf16.msra.mxu0 0
        %436 = vmatprep.subr.bf16.mxu0 0
        %437 = vmatpush1.bf16.msra.mxu0 0
        %438 = vmatprep.subr.bf16.mxu0 0
        %439 = vmatpush1.bf16.msra.mxu0 0
        %440 = vmatprep.subr.bf16.mxu0 0
        %441 = vmatpush1.bf16.msra.mxu0 0
        %442 = vmatprep.mubr.bf16.mxu0 0
        %443 = vmatmul.mubr.bf16.gmra.mrb[0].mxu0 %v392
        %v444 = vpop.f32.mrb[0].mxu0
        %v445 = vadd.f32 %v357, %v444
        %v446 = vpop.f32.mrb[0].mxu0
        %v447 = vpop.f32.mrb[0].mxu0
        %v448 = vadd.f32 %v357, %v447
        %v449 = vpop.f32.mrb[0].mxu0
        %450 = vmatprep.mubr.bf16.mxu0 0
        %451 = vmatmul.mubr.bf16.gmra.mrb[0].mxu0 %v395
        %v452 = vpop.f32.mrb[0].mxu0
        %v453 = vadd.f32 %v357, %v452
        %v454 = vpop.f32.mrb[0].mxu0
        %v455 = vpop.f32.mrb[0].mxu0
        %v456 = vadd.f32 %v357, %v455
        %v457 = vpop.f32.mrb[0].mxu0
        %458 = vmatprep.mubr.bf16.mxu0 0
        %459 = vmatmul.mubr.bf16.gmra.mrb[0].mxu0 %v398
        %v460 = vpop.f32.mrb[0].mxu0
        %v461 = vadd.f32 %v357, %v460
        %v462 = vpop.f32.mrb[0].mxu0
        %v463 = vpop.f32.mrb[0].mxu0
        %v464 = vadd.f32 %v357, %v463
        %v465 = vpop.f32.mrb[0].mxu0
        %466 = vmatprep.mubr.bf16.mxu0 0
        %467 = vmatmul.mubr.bf16.gmra.mrb[0].mxu0 %v401
        %v468 = vpop.f32.mrb[0].mxu0
        %v469 = vadd.f32 %v357, %v468
        %v470 = vpop.f32.mrb[0].mxu0
        %v471 = vpop.f32.mrb[0].mxu0
        %v472 = vadd.f32 %v357, %v471
        %v473 = vpop.f32.mrb[0].mxu0
        %474 = vdwg.mxu0
        %v475 = vmax.f32 %v445, 0.0
        %v476 = vmax.f32 %v448, 0.0
        %v477 = vmax.f32 %v453, 0.0
        %v478 = vmax.f32 %v456, 0.0
        %v479 = vmax.f32 %v461, 0.0
        %v480 = vmax.f32 %v464, 0.0
        %v481 = vmax.f32 %v469, 0.0
        %v482 = vmax.f32 %v472, 0.0
        %s483 = scalar_lea.vmem %s311, 32 [#allocation2]
        %v484 = vld [vmem:[%s483] sm:$0xf]
        %v485 = vld [vmem:[%s483 + $0x4] sm:$0xf]
        %v486 = vld [vmem:[%s483 + $0x8] sm:$0xf]
        %v487 = vld [vmem:[%s483 + $0xc] sm:$0xf]
        %v488 = vld [vmem:[%s483 + $0x10] sm:$0xf]
        %v489 = vld [vmem:[%s483 + $0x14] sm:$0xf]
        %v490 = vld [vmem:[%s483 + $0x18] sm:$0xf]
        %v491 = vld [vmem:[%s483 + $0x1c] sm:$0xf]
        %v500 = vunpack.c.l.b16 %v484
        %v501 = vunpack.c.l.b16 %v485
        %v502 = vunpack.c.l.b16 %v486
        %v503 = vunpack.c.l.b16 %v487
        %v504 = vunpack.c.l.b16 %v488
        %v505 = vunpack.c.l.b16 %v489
        %v506 = vunpack.c.l.b16 %v490
        %v507 = vunpack.c.l.b16 %v491
        %v508 = vpack.c.b16 %v501, %v500
        %v509 = vpack.c.b16 %v503, %v502
        %v510 = vpack.c.b16 %v505, %v504
        %v511 = vpack.c.b16 %v507, %v506
        %v513 = vsel %vm390, %v508, 0
        %v516 = vsel %vm390, %v509, 0
        %v519 = vsel %vm390, %v510, 0
        %v522 = vsel %vm390, %v511, 0
        %524 = vmatprep.subr.bf16.mxu0 0
        %525 = vmatpush1.bf16.msra.mxu0 %v387
        %526 = vmatprep.subr.bf16.mxu0 0
        %527 = vmatpush1.bf16.msra.mxu0 %v408
        %528 = vmatprep.subr.bf16.mxu0 0
        %529 = vmatpush1.bf16.msra.mxu0 0
        %530 = vmatprep.subr.bf16.mxu0 0
        %531 = vmatpush1.bf16.msra.mxu0 0
        %532 = vmatprep.subr.bf16.mxu0 0
        %533 = vmatpush1.bf16.msra.mxu0 0
        %534 = vmatprep.subr.bf16.mxu0 0
        %535 = vmatpush1.bf16.msra.mxu0 0
        %536 = vmatprep.subr.bf16.mxu0 0
        %537 = vmatpush1.bf16.msra.mxu0 0
        %538 = vmatprep.subr.bf16.mxu0 0
        %539 = vmatpush1.bf16.msra.mxu0 0
        %540 = vmatprep.subr.bf16.mxu0 0
        %541 = vmatpush1.bf16.msra.mxu0 0
        %542 = vmatprep.subr.bf16.mxu0 0
        %543 = vmatpush1.bf16.msra.mxu0 0
        %544 = vmatprep.subr.bf16.mxu0 0
        %545 = vmatpush1.bf16.msra.mxu0 0
        %546 = vmatprep.subr.bf16.mxu0 0
        %547 = vmatpush1.bf16.msra.mxu0 0
        %548 = vmatprep.subr.bf16.mxu0 0
        %549 = vmatpush1.bf16.msra.mxu0 0
        %550 = vmatprep.subr.bf16.mxu0 0
        %551 = vmatpush1.bf16.msra.mxu0 0
        %552 = vmatprep.subr.bf16.mxu0 0
        %553 = vmatpush1.bf16.msra.mxu0 0
        %554 = vmatprep.subr.bf16.mxu0 0
        %555 = vmatpush1.bf16.msra.mxu0 0
        %556 = vmatprep.mubr.bf16.mxu0 0
        %557 = vmatmul.mubr.bf16.gmra.mrb[0].mxu0 %v513
        %v558 = vpop.f32.mrb[0].mxu0
        %v559 = vadd.f32 %v357, %v558
        %v560 = vpop.f32.mrb[0].mxu0
        %v561 = vpop.f32.mrb[0].mxu0
        %v562 = vadd.f32 %v357, %v561
        %v563 = vpop.f32.mrb[0].mxu0
        %564 = vmatprep.mubr.bf16.mxu0 0
        %565 = vmatmul.mubr.bf16.gmra.mrb[0].mxu0 %v516
        %v566 = vpop.f32.mrb[0].mxu0
        %v567 = vadd.f32 %v357, %v566
        %v568 = vpop.f32.mrb[0].mxu0
        %v569 = vpop.f32.mrb[0].mxu0
        %v570 = vadd.f32 %v357, %v569
        %v571 = vpop.f32.mrb[0].mxu0
        %572 = vmatprep.mubr.bf16.mxu0 0
        %573 = vmatmul.mubr.bf16.gmra.mrb[0].mxu0 %v519
        %v574 = vpop.f32.mrb[0].mxu0
        %v575 = vadd.f32 %v357, %v574
        %v576 = vpop.f32.mrb[0].mxu0
        %v577 = vpop.f32.mrb[0].mxu0
        %v578 = vadd.f32 %v357, %v577
        %v579 = vpop.f32.mrb[0].mxu0
        %580 = vmatprep.mubr.bf16.mxu0 0
        %581 = vmatmul.mubr.bf16.gmra.mrb[0].mxu0 %v522
        %v582 = vpop.f32.mrb[0].mxu0
        %v583 = vadd.f32 %v357, %v582
        %v584 = vpop.f32.mrb[0].mxu0
        %v585 = vpop.f32.mrb[0].mxu0
        %v586 = vadd.f32 %v357, %v585
        %v587 = vpop.f32.mrb[0].mxu0
        %588 = vdwg.mxu0
        %v589 = vmax.f32 %v559, 0.0
        %v590 = vmax.f32 %v562, 0.0
        %v591 = vmax.f32 %v567, 0.0
        %v592 = vmax.f32 %v570, 0.0
        %v593 = vmax.f32 %v575, 0.0
        %v594 = vmax.f32 %v578, 0.0
        %v595 = vmax.f32 %v583, 0.0
        %v596 = vmax.f32 %v586, 0.0
        %v597 = vmax.f32 %v475, %v589
        %v598 = vmax.f32 %v476, %v590
        %v599 = vmax.f32 %v477, %v591
        %v600 = vmax.f32 %v478, %v592
        %v601 = vmax.f32 %v479, %v593
        %v602 = vmax.f32 %v480, %v594
        %v603 = vmax.f32 %v481, %v595
        %v604 = vmax.f32 %v482, %v596
        %s605 = scalar_lea.vmem %s311, 64 [#allocation2]
        %v606 = vld [vmem:[%s605] sm:$0xf]
        %v607 = vld [vmem:[%s605 + $0x4] sm:$0xf]
        %v608 = vld [vmem:[%s605 + $0x8] sm:$0xf]
        %v609 = vld [vmem:[%s605 + $0xc] sm:$0xf]
        %v610 = vld [vmem:[%s605 + $0x10] sm:$0xf]
        %v611 = vld [vmem:[%s605 + $0x14] sm:$0xf]
        %v612 = vld [vmem:[%s605 + $0x18] sm:$0xf]
        %v613 = vld [vmem:[%s605 + $0x1c] sm:$0xf]
        %v622 = vunpack.c.l.b16 %v606
        %v623 = vunpack.c.l.b16 %v607
        %v624 = vunpack.c.l.b16 %v608
        %v625 = vunpack.c.l.b16 %v609
        %v626 = vunpack.c.l.b16 %v610
        %v627 = vunpack.c.l.b16 %v611
        %v628 = vunpack.c.l.b16 %v612
        %v629 = vunpack.c.l.b16 %v613
        %v630 = vpack.c.b16 %v623, %v622
        %v631 = vpack.c.b16 %v625, %v624
        %v632 = vpack.c.b16 %v627, %v626
        %v633 = vpack.c.b16 %v629, %v628
        %v635 = vsel %vm390, %v630, 0
        %v638 = vsel %vm390, %v631, 0
        %v641 = vsel %vm390, %v632, 0
        %v644 = vsel %vm390, %v633, 0
        %646 = vmatprep.subr.bf16.mxu0 0
        %647 = vmatpush1.bf16.msra.mxu0 %v387
        %648 = vmatprep.subr.bf16.mxu0 0
        %649 = vmatpush1.bf16.msra.mxu0 %v408
        %650 = vmatprep.subr.bf16.mxu0 0
        %651 = vmatpush1.bf16.msra.mxu0 0
        %652 = vmatprep.subr.bf16.mxu0 0
        %653 = vmatpush1.bf16.msra.mxu0 0
        %654 = vmatprep.subr.bf16.mxu0 0
        %655 = vmatpush1.bf16.msra.mxu0 0
        %656 = vmatprep.subr.bf16.mxu0 0
        %657 = vmatpush1.bf16.msra.mxu0 0
        %658 = vmatprep.subr.bf16.mxu0 0
        %659 = vmatpush1.bf16.msra.mxu0 0
        %660 = vmatprep.subr.bf16.mxu0 0
        %661 = vmatpush1.bf16.msra.mxu0 0
        %662 = vmatprep.subr.bf16.mxu0 0
        %663 = vmatpush1.bf16.msra.mxu0 0
        %664 = vmatprep.subr.bf16.mxu0 0
        %665 = vmatpush1.bf16.msra.mxu0 0
        %666 = vmatprep.subr.bf16.mxu0 0
        %667 = vmatpush1.bf16.msra.mxu0 0
        %668 = vmatprep.subr.bf16.mxu0 0
        %669 = vmatpush1.bf16.msra.mxu0 0
        %670 = vmatprep.subr.bf16.mxu0 0
        %671 = vmatpush1.bf16.msra.mxu0 0
        %672 = vmatprep.subr.bf16.mxu0 0
        %673 = vmatpush1.bf16.msra.mxu0 0
        %674 = vmatprep.subr.bf16.mxu0 0
        %675 = vmatpush1.bf16.msra.mxu0 0
        %676 = vmatprep.subr.bf16.mxu0 0
        %677 = vmatpush1.bf16.msra.mxu0 0
        %678 = vmatprep.mubr.bf16.mxu0 0
        %679 = vmatmul.mubr.bf16.gmra.mrb[0].mxu0 %v635
        %v680 = vpop.f32.mrb[0].mxu0
        %v681 = vadd.f32 %v357, %v680
        %v682 = vpop.f32.mrb[0].mxu0
        %v683 = vpop.f32.mrb[0].mxu0
        %v684 = vadd.f32 %v357, %v683
        %v685 = vpop.f32.mrb[0].mxu0
        %686 = vmatprep.mubr.bf16.mxu0 0
        %687 = vmatmul.mubr.bf16.gmra.mrb[0].mxu0 %v638
        %v688 = vpop.f32.mrb[0].mxu0
        %v689 = vadd.f32 %v357, %v688
        %v690 = vpop.f32.mrb[0].mxu0
        %v691 = vpop.f32.mrb[0].mxu0
        %v692 = vadd.f32 %v357, %v691
        %v693 = vpop.f32.mrb[0].mxu0
        %694 = vmatprep.mubr.bf16.mxu0 0
        %695 = vmatmul.mubr.bf16.gmra.mrb[0].mxu0 %v641
        %v696 = vpop.f32.mrb[0].mxu0
        %v697 = vadd.f32 %v357, %v696
        %v698 = vpop.f32.mrb[0].mxu0
        %v699 = vpop.f32.mrb[0].mxu0
        %v700 = vadd.f32 %v357, %v699
        %v701 = vpop.f32.mrb[0].mxu0
        %702 = vmatprep.mubr.bf16.mxu0 0
        %703 = vmatmul.mubr.bf16.gmra.mrb[0].mxu0 %v644
        %v704 = vpop.f32.mrb[0].mxu0
        %v705 = vadd.f32 %v357, %v704
        %v706 = vpop.f32.mrb[0].mxu0
        %v707 = vpop.f32.mrb[0].mxu0
        %v708 = vadd.f32 %v357, %v707
        %v709 = vpop.f32.mrb[0].mxu0
        %710 = vdwg.mxu0
        %v711 = vmax.f32 %v681, 0.0
        %v712 = vmax.f32 %v684, 0.0
        %v713 = vmax.f32 %v689, 0.0
        %v714 = vmax.f32 %v692, 0.0
        %v715 = vmax.f32 %v697, 0.0
        %v716 = vmax.f32 %v700, 0.0
        %v717 = vmax.f32 %v705, 0.0
        %v718 = vmax.f32 %v708, 0.0
        %s719 = scalar_lea.vmem %s311, 96 [#allocation2]
        %v720 = vld [vmem:[%s719] sm:$0xf]
        %v721 = vld [vmem:[%s719 + $0x4] sm:$0xf]
        %v722 = vld [vmem:[%s719 + $0x8] sm:$0xf]
        %v723 = vld [vmem:[%s719 + $0xc] sm:$0xf]
        %v724 = vld [vmem:[%s719 + $0x10] sm:$0xf]
        %v725 = vld [vmem:[%s719 + $0x14] sm:$0xf]
        %v726 = vld [vmem:[%s719 + $0x18] sm:$0xf]
        %v727 = vld [vmem:[%s719 + $0x1c] sm:$0xf]
        %v736 = vunpack.c.l.b16 %v720
        %v737 = vunpack.c.l.b16 %v721
        %v738 = vunpack.c.l.b16 %v722
        %v739 = vunpack.c.l.b16 %v723
        %v740 = vunpack.c.l.b16 %v724
        %v741 = vunpack.c.l.b16 %v725
        %v742 = vunpack.c.l.b16 %v726
        %v743 = vunpack.c.l.b16 %v727
        %v744 = vpack.c.b16 %v737, %v736
        %v745 = vpack.c.b16 %v739, %v738
        %v746 = vpack.c.b16 %v741, %v740
        %v747 = vpack.c.b16 %v743, %v742
        %v749 = vsel %vm390, %v744, 0
        %v752 = vsel %vm390, %v745, 0
        %v755 = vsel %vm390, %v746, 0
        %v758 = vsel %vm390, %v747, 0
        %760 = vmatprep.subr.bf16.mxu0 0
        %761 = vmatpush1.bf16.msra.mxu0 %v387
        %762 = vmatprep.subr.bf16.mxu0 0
        %763 = vmatpush1.bf16.msra.mxu0 %v408
        %764 = vmatprep.subr.bf16.mxu0 0
        %765 = vmatpush1.bf16.msra.mxu0 0
        %766 = vmatprep.subr.bf16.mxu0 0
        %767 = vmatpush1.bf16.msra.mxu0 0
        %768 = vmatprep.subr.bf16.mxu0 0
        %769 = vmatpush1.bf16.msra.mxu0 0
        %770 = vmatprep.subr.bf16.mxu0 0
        %771 = vmatpush1.bf16.msra.mxu0 0
        %772 = vmatprep.subr.bf16.mxu0 0
        %773 = vmatpush1.bf16.msra.mxu0 0
        %774 = vmatprep.subr.bf16.mxu0 0
        %775 = vmatpush1.bf16.msra.mxu0 0
        %776 = vmatprep.subr.bf16.mxu0 0
        %777 = vmatpush1.bf16.msra.mxu0 0
        %778 = vmatprep.subr.bf16.mxu0 0
        %779 = vmatpush1.bf16.msra.mxu0 0
        %780 = vmatprep.subr.bf16.mxu0 0
        %781 = vmatpush1.bf16.msra.mxu0 0
        %782 = vmatprep.subr.bf16.mxu0 0
        %783 = vmatpush1.bf16.msra.mxu0 0
        %784 = vmatprep.subr.bf16.mxu0 0
        %785 = vmatpush1.bf16.msra.mxu0 0
        %786 = vmatprep.subr.bf16.mxu0 0
        %787 = vmatpush1.bf16.msra.mxu0 0
        %788 = vmatprep.subr.bf16.mxu0 0
        %789 = vmatpush1.bf16.msra.mxu0 0
        %790 = vmatprep.subr.bf16.mxu0 0
        %791 = vmatpush1.bf16.msra.mxu0 0
        %792 = vmatprep.mubr.bf16.mxu0 0
        %793 = vmatmul.mubr.bf16.gmra.mrb[0].mxu0 %v749
        %v794 = vpop.f32.mrb[0].mxu0
        %v795 = vadd.f32 %v357, %v794
        %v796 = vpop.f32.mrb[0].mxu0
        %v797 = vpop.f32.mrb[0].mxu0
        %v798 = vadd.f32 %v357, %v797
        %v799 = vpop.f32.mrb[0].mxu0
        %800 = vmatprep.mubr.bf16.mxu0 0
        %801 = vmatmul.mubr.bf16.gmra.mrb[0].mxu0 %v752
        %v802 = vpop.f32.mrb[0].mxu0
        %v803 = vadd.f32 %v357, %v802
        %v804 = vpop.f32.mrb[0].mxu0
        %v805 = vpop.f32.mrb[0].mxu0
        %v806 = vadd.f32 %v357, %v805
        %v807 = vpop.f32.mrb[0].mxu0
        %808 = vmatprep.mubr.bf16.mxu0 0
        %809 = vmatmul.mubr.bf16.gmra.mrb[0].mxu0 %v755
        %v810 = vpop.f32.mrb[0].mxu0
        %v811 = vadd.f32 %v357, %v810
        %v812 = vpop.f32.mrb[0].mxu0
        %v813 = vpop.f32.mrb[0].mxu0
        %v814 = vadd.f32 %v357, %v813
        %v815 = vpop.f32.mrb[0].mxu0
        %816 = vmatprep.mubr.bf16.mxu0 0
        %817 = vmatmul.mubr.bf16.gmra.mrb[0].mxu0 %v758
        %v818 = vpop.f32.mrb[0].mxu0
        %v819 = vadd.f32 %v357, %v818
        %v820 = vpop.f32.mrb[0].mxu0
        %v821 = vpop.f32.mrb[0].mxu0
        %v822 = vadd.f32 %v357, %v821
        %v823 = vpop.f32.mrb[0].mxu0
        %824 = vdwg.mxu0
        %v825 = vmax.f32 %v795, 0.0
        %v826 = vmax.f32 %v798, 0.0
        %v827 = vmax.f32 %v803, 0.0
        %v828 = vmax.f32 %v806, 0.0
        %v829 = vmax.f32 %v811, 0.0
        %v830 = vmax.f32 %v814, 0.0
        %v831 = vmax.f32 %v819, 0.0
        %v832 = vmax.f32 %v822, 0.0
        %v833 = vmax.f32 %v711, %v825
        %v834 = vmax.f32 %v712, %v826
        %v835 = vmax.f32 %v713, %v827
        %v836 = vmax.f32 %v714, %v828
        %v837 = vmax.f32 %v715, %v829
        %v838 = vmax.f32 %v716, %v830
        %v839 = vmax.f32 %v717, %v831
        %v840 = vmax.f32 %v718, %v832
        %v841 = vmax.f32 %v597, %v833
        %v842 = vmax.f32 %v598, %v834
        %v843 = vmax.f32 %v599, %v835
        %v844 = vmax.f32 %v600, %v836
        %v845 = vmax.f32 %v601, %v837
        %v846 = vmax.f32 %v602, %v838
        %v847 = vmax.f32 %v603, %v839
        %v848 = vmax.f32 %v604, %v840
        %849 = vst [vmem:[%s337] sm:$0xff] %v841
        %850 = vst [vmem:[%s337 + $0x8] sm:$0xff] %v842
        %851 = vst [vmem:[%s337 + $0x10] sm:$0xff] %v843
        %852 = vst [vmem:[%s337 + $0x18] sm:$0xff] %v844
        %853 = vst [vmem:[%s337 + $0x20] sm:$0xff] %v845
        %854 = vst [vmem:[%s337 + $0x28] sm:$0xff] %v846
        %855 = vst [vmem:[%s337 + $0x30] sm:$0xff] %v847
        %856 = vst [vmem:[%s337 + $0x38] sm:$0xff] %v848
        %s857 = smul.u32 8, %s14
        %p858 = scmp.lt.s32.totalorder %s857, 15
        %s859 = scalar_select %p858, %s857, 15
        %s860 = smul.addr %s859, 8
        %s861 = scalar_lea.vmem %s3, %s860
        // Predicated region
        $region74: #{yolo_forward.3} parent=68 // pred_check
          %p862 = pneg %p100
        $region75: #{yolo_forward.3} parent=68 // pred_check_branch
          %864 = sbr.rel (%p862) target = $region77
        $region76: #{yolo_forward.3} parent=68 // pred_region
          %s865 = smul.u32 8, %s14
        $region77: #{yolo_forward.3} parent=68 // pred_fallthru
          _
      $region69: #{yolo_forward.3} parent=5 // pred_fallthru
        _
      %p866 = scmp.le.s32.totalorder 2, %s9
      // Predicated region
      $region78: #{yolo_forward.3} parent=5 // pred_check
        %p867 = pneg %p866
      $region79: #{yolo_forward.3} parent=5 // pred_check_branch
        %869 = sbr.rel (%p867) target = $region81
      $region80: #{yolo_forward.3} parent=5 // pred_region
        %s870 = ssub.s32 %s9, 2
        // Predicated region
        $region82: #{yolo_forward.3} parent=80 // pred_check
          %p871 = pneg %p106
        $region83: #{yolo_forward.3} parent=80 // pred_check_branch
          %873 = sbr.rel (%p871) target = $region85
        $region84: #{yolo_forward.3} parent=80 // pred_region
          %s874 = smul.u32 8, %s15
          %p875 = scmp.lt.s32.totalorder %s874, 15
          %s876 = scalar_select %p875, %s874, 15
          %s877 = smul.addr %s876, 8
          %s878 = scalar_lea.vmem %s3, %s877
        $region85: #{yolo_forward.3} parent=80 // pred_fallthru
          _
      $region81: #{yolo_forward.3} parent=5 // pred_fallthru
        _
    $region6: #{yolo_forward.3} parent=1 // loop_footer
      %s13 = sadd.s32 1, %s9
    $region7: #{yolo_forward.3} parent=1 // loop_footer_branch
      %8 = sbr.rel target = $region3
    $region8: #{yolo_forward.3} parent=1 // loop_exit
      _

// kernel: yolo_forward.4
$region0: #{yolo_forward.4}
  #allocation0 [shape = 'u32[]', space=smem, size = 0x4, offset = 0x4, fixed_abs, tag = 'smem constant byte address 0x4 - core index']
  #allocation1 [shape = 'u32[144,128]{1,0:T(1,128)}', space=vmem, size = 0x12000, scoped, tag = 'internal scratch']
  %s0 = inlined_call_operand.vmem [shape: bf16[4,32,288], index: 0, kind: input, shape index: {}]
  %s1 = inlined_call_operand.vmem [shape: bf16[288,128], index: 1, kind: input, shape index: {}]
  %s2 = inlined_call_operand.vmem [shape: f32[1,128], index: 2, kind: input, shape index: {}]
  %s3 = inlined_call_operand.vmem [shape: f32[32,128], index: 3, kind: output, shape index: {}]
  %s4 = sld [smem:[#allocation0]]
  $region22: #{yolo_forward.4} parent=0
    _
  %s6 = ssub.s32 1, %s4
  %s7 = scalar_select 0, %s6, %s4
  // Predicated region
  $region2: #{yolo_forward.4} parent=0 // pred_check
    _
  $region3: #{yolo_forward.4} parent=0 // pred_check_branch
    %9 = sbr.rel (0) target = $region5
  $region4: #{yolo_forward.4} parent=0 // pred_region
    _
  $region5: #{yolo_forward.4} parent=0 // pred_fallthru
    _
  // Predicated region
  $region6: #{yolo_forward.4} parent=0 // pred_check
    _
  $region7: #{yolo_forward.4} parent=0 // pred_check_branch
    %11 = sbr.rel (0) target = $region9
  $region8: #{yolo_forward.4} parent=0 // pred_region
    _
  $region9: #{yolo_forward.4} parent=0 // pred_fallthru
    _
  // Predicated region
  $region10: #{yolo_forward.4} parent=0 // pred_check
    _
  $region11: #{yolo_forward.4} parent=0 // pred_check_branch
    %13 = sbr.rel (0) target = $region13
  $region12: #{yolo_forward.4} parent=0 // pred_region
    _
  $region13: #{yolo_forward.4} parent=0 // pred_fallthru
    _
  %v15 = vld [vmem:[%s1] sm:$0xf]
  %v16 = vld [vmem:[%s1 + $0x4] sm:$0xf]
  %v17 = vld [vmem:[%s1 + $0x8] sm:$0xf]
  %v18 = vld [vmem:[%s1 + $0xc] sm:$0xf]
  %v19 = vld [vmem:[%s1 + $0x10] sm:$0xf]
  %v20 = vld [vmem:[%s1 + $0x14] sm:$0xf]
  %v21 = vld [vmem:[%s1 + $0x18] sm:$0xf]
  %v22 = vld [vmem:[%s1 + $0x1c] sm:$0xf]
  %v23 = vld [vmem:[%s1 + $0x20] sm:$0xf]
  %v24 = vld [vmem:[%s1 + $0x24] sm:$0xf]
  %v25 = vld [vmem:[%s1 + $0x28] sm:$0xf]
  %v26 = vld [vmem:[%s1 + $0x2c] sm:$0xf]
  %v27 = vld [vmem:[%s1 + $0x30] sm:$0xf]
  %v28 = vld [vmem:[%s1 + $0x34] sm:$0xf]
  %v29 = vld [vmem:[%s1 + $0x38] sm:$0xf]
  %v30 = vld [vmem:[%s1 + $0x3c] sm:$0xf]
  %v31 = vld [vmem:[%s1 + $0x40] sm:$0xf]
  %v32 = vld [vmem:[%s1 + $0x44] sm:$0xf]
  %v33 = vld [vmem:[%s1 + $0x48] sm:$0xf]
  %v34 = vld [vmem:[%s1 + $0x4c] sm:$0xf]
  %v35 = vld [vmem:[%s1 + $0x50] sm:$0xf]
  %v36 = vld [vmem:[%s1 + $0x54] sm:$0xf]
  %v37 = vld [vmem:[%s1 + $0x58] sm:$0xf]
  %v38 = vld [vmem:[%s1 + $0x5c] sm:$0xf]
  %v39 = vld [vmem:[%s1 + $0x60] sm:$0xf]
  %v40 = vld [vmem:[%s1 + $0x64] sm:$0xf]
  %v41 = vld [vmem:[%s1 + $0x68] sm:$0xf]
  %v42 = vld [vmem:[%s1 + $0x6c] sm:$0xf]
  %v43 = vld [vmem:[%s1 + $0x70] sm:$0xf]
  %v44 = vld [vmem:[%s1 + $0x74] sm:$0xf]
  %v45 = vld [vmem:[%s1 + $0x78] sm:$0xf]
  %v46 = vld [vmem:[%s1 + $0x7c] sm:$0xf]
  %v47 = vld [vmem:[%s1 + $0x80] sm:$0xf]
  %v48 = vld [vmem:[%s1 + $0x84] sm:$0xf]
  %v49 = vld [vmem:[%s1 + $0x88] sm:$0xf]
  %v50 = vld [vmem:[%s1 + $0x8c] sm:$0xf]
  %v51 = vld [vmem:[%s2] sm:$0x1]
  %v52 = vld [vmem:[%s0] sm:$0xff]
  %v53 = vld [vmem:[%s0 + $0x8] sm:$0xf]
  %v54 = vld [vmem:[%s0 + $0xc] sm:$0xff]
  %v55 = vld [vmem:[%s0 + $0x14] sm:$0xf]
  %v56 = vld [vmem:[%s0 + $0x18] sm:$0xff]
  %v57 = vld [vmem:[%s0 + $0x20] sm:$0xf]
  %v58 = vld [vmem:[%s0 + $0x24] sm:$0xff]
  %v59 = vld [vmem:[%s0 + $0x2c] sm:$0xf]
  %v61 = vlaneseq
  %v62 = vshrl.u32 %v61, 7
  %v63 = vsub.s32 0, %v62
  %v64 = vrot.slane %v51, %v63
  %v74 = vunpack.c.l.b16 %v52
  %v75 = vunpack.c.h.b16 %v52
  %v76 = vunpack.c.l.b16 %v53
  %v77 = vunpack.c.l.b16 %v54
  %v78 = vunpack.c.h.b16 %v54
  %v79 = vunpack.c.l.b16 %v55
  %v80 = vunpack.c.l.b16 %v56
  %v81 = vunpack.c.h.b16 %v56
  %v82 = vunpack.c.l.b16 %v57
  %v83 = vunpack.c.l.b16 %v58
  %v84 = vunpack.c.h.b16 %v58
  %v85 = vunpack.c.l.b16 %v59
  %v86 = vpack.c.b16 %v77, %v74
  %v87 = vpack.c.b16 %v78, %v75
  %v88 = vpack.c.b16 %v79, %v76
  %v89 = vpack.c.b16 %v83, %v80
  %v90 = vpack.c.b16 %v84, %v81
  %v91 = vpack.c.b16 %v85, %v82
  %v132 = vunpack.c.l.b16 %v15
  %v133 = vunpack.c.l.b16 %v16
  %v134 = vunpack.c.l.b16 %v17
  %v135 = vunpack.c.l.b16 %v18
  %v136 = vunpack.c.l.b16 %v19
  %v137 = vunpack.c.l.b16 %v20
  %v138 = vunpack.c.l.b16 %v21
  %v139 = vunpack.c.l.b16 %v22
  %v140 = vunpack.c.l.b16 %v23
  %v141 = vunpack.c.l.b16 %v24
  %v142 = vunpack.c.l.b16 %v25
  %v143 = vunpack.c.l.b16 %v26
  %v144 = vunpack.c.l.b16 %v27
  %v145 = vunpack.c.l.b16 %v28
  %v146 = vunpack.c.l.b16 %v29
  %v147 = vunpack.c.l.b16 %v30
  %v148 = vunpack.c.l.b16 %v31
  %v149 = vunpack.c.l.b16 %v32
  %v150 = vunpack.c.l.b16 %v33
  %v151 = vunpack.c.l.b16 %v34
  %v152 = vunpack.c.l.b16 %v35
  %v153 = vunpack.c.l.b16 %v36
  %v154 = vunpack.c.l.b16 %v37
  %v155 = vunpack.c.l.b16 %v38
  %v156 = vunpack.c.l.b16 %v39
  %v157 = vunpack.c.l.b16 %v40
  %v158 = vunpack.c.l.b16 %v41
  %v159 = vunpack.c.l.b16 %v42
  %v160 = vunpack.c.l.b16 %v43
  %v161 = vunpack.c.l.b16 %v44
  %v162 = vunpack.c.l.b16 %v45
  %v163 = vunpack.c.l.b16 %v46
  %v164 = vunpack.c.l.b16 %v47
  %v165 = vunpack.c.l.b16 %v48
  %v166 = vunpack.c.l.b16 %v49
  %v167 = vunpack.c.l.b16 %v50
  %v168 = vpack.c.b16 %v133, %v132
  %v169 = vpack.c.b16 %v135, %v134
  %v170 = vpack.c.b16 %v137, %v136
  %v171 = vpack.c.b16 %v139, %v138
  %v172 = vpack.c.b16 %v141, %v140
  %v173 = vpack.c.b16 %v143, %v142
  %v174 = vpack.c.b16 %v145, %v144
  %v175 = vpack.c.b16 %v147, %v146
  %v176 = vpack.c.b16 %v149, %v148
  %v177 = vpack.c.b16 %v151, %v150
  %v178 = vpack.c.b16 %v153, %v152
  %v179 = vpack.c.b16 %v155, %v154
  %v180 = vpack.c.b16 %v157, %v156
  %v181 = vpack.c.b16 %v159, %v158
  %v182 = vpack.c.b16 %v161, %v160
  %v183 = vpack.c.b16 %v163, %v162
  %v184 = vpack.c.b16 %v165, %v164
  %v185 = vpack.c.b16 %v167, %v166
  %vm204 = vcmask 261120
  %v206 = vsel %vm204, %v88, 0
  %v209 = vsel %vm204, %v91, 0
  %211 = vmatprep.subr.bf16.mxu0 0
  %212 = vmatpush1.bf16.msra.mxu0 %v168
  %213 = vmatprep.subr.bf16.mxu0 0
  %214 = vmatpush1.bf16.msra.mxu0 %v169
  %215 = vmatprep.subr.bf16.mxu0 0
  %216 = vmatpush1.bf16.msra.mxu0 %v170
  %217 = vmatprep.subr.bf16.mxu0 0
  %218 = vmatpush1.bf16.msra.mxu0 %v171
  %219 = vmatprep.subr.bf16.mxu0 0
  %220 = vmatpush1.bf16.msra.mxu0 %v172
  %221 = vmatprep.subr.bf16.mxu0 0
  %222 = vmatpush1.bf16.msra.mxu0 %v173
  %223 = vmatprep.subr.bf16.mxu0 0
  %224 = vmatpush1.bf16.msra.mxu0 %v174
  %225 = vmatprep.subr.bf16.mxu0 0
  %226 = vmatpush1.bf16.msra.mxu0 %v175
  %227 = vmatprep.subr.bf16.mxu0 0
  %228 = vmatpush1.bf16.msra.mxu0 %v176
  %229 = vmatprep.subr.bf16.mxu0 0
  %230 = vmatpush1.bf16.msra.mxu0 %v177
  %231 = vmatprep.subr.bf16.mxu0 0
  %232 = vmatpush1.bf16.msra.mxu0 %v178
  %233 = vmatprep.subr.bf16.mxu0 0
  %234 = vmatpush1.bf16.msra.mxu0 %v179
  %235 = vmatprep.subr.bf16.mxu0 0
  %236 = vmatpush1.bf16.msra.mxu0 %v180
  %237 = vmatprep.subr.bf16.mxu0 0
  %238 = vmatpush1.bf16.msra.mxu0 %v181
  %239 = vmatprep.subr.bf16.mxu0 0
  %240 = vmatpush1.bf16.msra.mxu0 %v182
  %241 = vmatprep.subr.bf16.mxu0 0
  %242 = vmatpush1.bf16.msra.mxu0 %v183
  %243 = vmatprep.mubr.bf16.mxu0 %v87
  %244 = vmatmul.mubr.bf16.gmra.mrb[0].mxu0 %v86
  %v245 = vpop.f32.mrb[0].mxu0
  %v246 = vadd.f32 %v64, %v245
  %v247 = vpop.f32.mrb[0].mxu0
  %v248 = vpop.f32.mrb[0].mxu0
  %v249 = vadd.f32 %v64, %v248
  %v250 = vpop.f32.mrb[0].mxu0
  %251 = vmatprep.mubr.bf16.mxu0 %v90
  %252 = vmatmul.mubr.bf16.gmra.mrb[0].mxu0 %v89
  %v253 = vpop.f32.mrb[0].mxu0
  %v254 = vadd.f32 %v64, %v253
  %v255 = vpop.f32.mrb[0].mxu0
  %v256 = vpop.f32.mrb[0].mxu0
  %v257 = vadd.f32 %v64, %v256
  %v258 = vpop.f32.mrb[0].mxu0
  %259 = vdwg.mxu0
  %260 = vmatprep.subr.bf16.mxu0 0
  %261 = vmatpush1.bf16.msra.mxu0 %v184
  %262 = vmatprep.subr.bf16.mxu0 0
  %263 = vmatpush1.bf16.msra.mxu0 %v185
  %264 = vmatprep.subr.bf16.mxu0 0
  %265 = vmatpush1.bf16.msra.mxu0 0
  %266 = vmatprep.subr.bf16.mxu0 0
  %267 = vmatpush1.bf16.msra.mxu0 0
  %268 = vmatprep.subr.bf16.mxu0 0
  %269 = vmatpush1.bf16.msra.mxu0 0
  %270 = vmatprep.subr.bf16.mxu0 0
  %271 = vmatpush1.bf16.msra.mxu0 0
  %272 = vmatprep.subr.bf16.mxu0 0
  %273 = vmatpush1.bf16.msra.mxu0 0
  %274 = vmatprep.subr.bf16.mxu0 0
  %275 = vmatpush1.bf16.msra.mxu0 0
  %276 = vmatprep.subr.bf16.mxu0 0
  %277 = vmatpush1.bf16.msra.mxu0 0
  %278 = vmatprep.subr.bf16.mxu0 0
  %279 = vmatpush1.bf16.msra.mxu0 0
  %280 = vmatprep.subr.bf16.mxu0 0
  %281 = vmatpush1.bf16.msra.mxu0 0
  %282 = vmatprep.subr.bf16.mxu0 0
  %283 = vmatpush1.bf16.msra.mxu0 0
  %284 = vmatprep.subr.bf16.mxu0 0
  %285 = vmatpush1.bf16.msra.mxu0 0
  %286 = vmatprep.subr.bf16.mxu0 0
  %287 = vmatpush1.bf16.msra.mxu0 0
  %288 = vmatprep.subr.bf16.mxu0 0
  %289 = vmatpush1.bf16.msra.mxu0 0
  %290 = vmatprep.subr.bf16.mxu0 0
  %291 = vmatpush1.bf16.msra.mxu0 0
  %292 = vmatprep.mubr.bf16.mxu0 0
  %293 = vmatmul.mubr.bf16.gmra.mrb[0].mxu0 %v206
  %v294 = vpop.f32.mrb[0].mxu0
  %v295 = vadd.f32 %v246, %v294
  %v296 = vpop.f32.mrb[0].mxu0
  %v297 = vpop.f32.mrb[0].mxu0
  %v298 = vadd.f32 %v249, %v297
  %v299 = vpop.f32.mrb[0].mxu0
  %300 = vmatprep.mubr.bf16.mxu0 0
  %301 = vmatmul.mubr.bf16.gmra.mrb[0].mxu0 %v209
  %v302 = vpop.f32.mrb[0].mxu0
  %v303 = vadd.f32 %v254, %v302
  %v304 = vpop.f32.mrb[0].mxu0
  %v305 = vpop.f32.mrb[0].mxu0
  %v306 = vadd.f32 %v257, %v305
  %v307 = vpop.f32.mrb[0].mxu0
  %308 = vdwg.mxu0
  %v309 = vmax.f32 %v295, 0.0
  %v310 = vmax.f32 %v298, 0.0
  %v311 = vmax.f32 %v303, 0.0
  %v312 = vmax.f32 %v306, 0.0
  %s313 = scalar_lea.vmem %s0, 48
  %v314 = vld [vmem:[%s313] sm:$0xff]
  %v315 = vld [vmem:[%s313 + $0x8] sm:$0xf]
  %v316 = vld [vmem:[%s313 + $0xc] sm:$0xff]
  %v317 = vld [vmem:[%s313 + $0x14] sm:$0xf]
  %v318 = vld [vmem:[%s313 + $0x18] sm:$0xff]
  %v319 = vld [vmem:[%s313 + $0x20] sm:$0xf]
  %v320 = vld [vmem:[%s313 + $0x24] sm:$0xff]
  %v321 = vld [vmem:[%s313 + $0x2c] sm:$0xf]
  %v330 = vunpack.c.l.b16 %v314
  %v331 = vunpack.c.h.b16 %v314
  %v332 = vunpack.c.l.b16 %v315
  %v333 = vunpack.c.l.b16 %v316
  %v334 = vunpack.c.h.b16 %v316
  %v335 = vunpack.c.l.b16 %v317
  %v336 = vunpack.c.l.b16 %v318
  %v337 = vunpack.c.h.b16 %v318
  %v338 = vunpack.c.l.b16 %v319
  %v339 = vunpack.c.l.b16 %v320
  %v340 = vunpack.c.h.b16 %v320
  %v341 = vunpack.c.l.b16 %v321
  %v342 = vpack.c.b16 %v333, %v330
  %v343 = vpack.c.b16 %v334, %v331
  %v344 = vpack.c.b16 %v335, %v332
  %v345 = vpack.c.b16 %v339, %v336
  %v346 = vpack.c.b16 %v340, %v337
  %v347 = vpack.c.b16 %v341, %v338
  %v353 = vsel %vm204, %v344, 0
  %v356 = vsel %vm204, %v347, 0
  %358 = vmatprep.subr.bf16.mxu0 0
  %359 = vmatpush1.bf16.msra.mxu0 %v168
  %360 = vmatprep.subr.bf16.mxu0 0
  %361 = vmatpush1.bf16.msra.mxu0 %v169
  %362 = vmatprep.subr.bf16.mxu0 0
  %363 = vmatpush1.bf16.msra.mxu0 %v170
  %364 = vmatprep.subr.bf16.mxu0 0
  %365 = vmatpush1.bf16.msra.mxu0 %v171
  %366 = vmatprep.subr.bf16.mxu0 0
  %367 = vmatpush1.bf16.msra.mxu0 %v172
  %368 = vmatprep.subr.bf16.mxu0 0
  %369 = vmatpush1.bf16.msra.mxu0 %v173
  %370 = vmatprep.subr.bf16.mxu0 0
  %371 = vmatpush1.bf16.msra.mxu0 %v174
  %372 = vmatprep.subr.bf16.mxu0 0
  %373 = vmatpush1.bf16.msra.mxu0 %v175
  %374 = vmatprep.subr.bf16.mxu0 0
  %375 = vmatpush1.bf16.msra.mxu0 %v176
  %376 = vmatprep.subr.bf16.mxu0 0
  %377 = vmatpush1.bf16.msra.mxu0 %v177
  %378 = vmatprep.subr.bf16.mxu0 0
  %379 = vmatpush1.bf16.msra.mxu0 %v178
  %380 = vmatprep.subr.bf16.mxu0 0
  %381 = vmatpush1.bf16.msra.mxu0 %v179
  %382 = vmatprep.subr.bf16.mxu0 0
  %383 = vmatpush1.bf16.msra.mxu0 %v180
  %384 = vmatprep.subr.bf16.mxu0 0
  %385 = vmatpush1.bf16.msra.mxu0 %v181
  %386 = vmatprep.subr.bf16.mxu0 0
  %387 = vmatpush1.bf16.msra.mxu0 %v182
  %388 = vmatprep.subr.bf16.mxu0 0
  %389 = vmatpush1.bf16.msra.mxu0 %v183
  %390 = vmatprep.mubr.bf16.mxu0 %v343
  %391 = vmatmul.mubr.bf16.gmra.mrb[0].mxu0 %v342
  %v392 = vpop.f32.mrb[0].mxu0
  %v393 = vadd.f32 %v64, %v392
  %v394 = vpop.f32.mrb[0].mxu0
  %v395 = vpop.f32.mrb[0].mxu0
  %v396 = vadd.f32 %v64, %v395
  %v397 = vpop.f32.mrb[0].mxu0
  %398 = vmatprep.mubr.bf16.mxu0 %v346
  %399 = vmatmul.mubr.bf16.gmra.mrb[0].mxu0 %v345
  %v400 = vpop.f32.mrb[0].mxu0
  %v401 = vadd.f32 %v64, %v400
  %v402 = vpop.f32.mrb[0].mxu0
  %v403 = vpop.f32.mrb[0].mxu0
  %v404 = vadd.f32 %v64, %v403
  %v405 = vpop.f32.mrb[0].mxu0
  %406 = vdwg.mxu0
  %407 = vmatprep.subr.bf16.mxu0 0
  %408 = vmatpush1.bf16.msra.mxu0 %v184
  %409 = vmatprep.subr.bf16.mxu0 0
  %410 = vmatpush1.bf16.msra.mxu0 %v185
  %411 = vmatprep.subr.bf16.mxu0 0
  %412 = vmatpush1.bf16.msra.mxu0 0
  %413 = vmatprep.subr.bf16.mxu0 0
  %414 = vmatpush1.bf16.msra.mxu0 0
  %415 = vmatprep.subr.bf16.mxu0 0
  %416 = vmatpush1.bf16.msra.mxu0 0
  %417 = vmatprep.subr.bf16.mxu0 0
  %418 = vmatpush1.bf16.msra.mxu0 0
  %419 = vmatprep.subr.bf16.mxu0 0
  %420 = vmatpush1.bf16.msra.mxu0 0
  %421 = vmatprep.subr.bf16.mxu0 0
  %422 = vmatpush1.bf16.msra.mxu0 0
  %423 = vmatprep.subr.bf16.mxu0 0
  %424 = vmatpush1.bf16.msra.mxu0 0
  %425 = vmatprep.subr.bf16.mxu0 0
  %426 = vmatpush1.bf16.msra.mxu0 0
  %427 = vmatprep.subr.bf16.mxu0 0
  %428 = vmatpush1.bf16.msra.mxu0 0
  %429 = vmatprep.subr.bf16.mxu0 0
  %430 = vmatpush1.bf16.msra.mxu0 0
  %431 = vmatprep.subr.bf16.mxu0 0
  %432 = vmatpush1.bf16.msra.mxu0 0
  %433 = vmatprep.subr.bf16.mxu0 0
  %434 = vmatpush1.bf16.msra.mxu0 0
  %435 = vmatprep.subr.bf16.mxu0 0
  %436 = vmatpush1.bf16.msra.mxu0 0
  %437 = vmatprep.subr.bf16.mxu0 0
  %438 = vmatpush1.bf16.msra.mxu0 0
  %439 = vmatprep.mubr.bf16.mxu0 0
  %440 = vmatmul.mubr.bf16.gmra.mrb[0].mxu0 %v353
  %v441 = vpop.f32.mrb[0].mxu0
  %v442 = vadd.f32 %v393, %v441
  %v443 = vpop.f32.mrb[0].mxu0
  %v444 = vpop.f32.mrb[0].mxu0
  %v445 = vadd.f32 %v396, %v444
  %v446 = vpop.f32.mrb[0].mxu0
  %447 = vmatprep.mubr.bf16.mxu0 0
  %448 = vmatmul.mubr.bf16.gmra.mrb[0].mxu0 %v356
  %v449 = vpop.f32.mrb[0].mxu0
  %v450 = vadd.f32 %v401, %v449
  %v451 = vpop.f32.mrb[0].mxu0
  %v452 = vpop.f32.mrb[0].mxu0
  %v453 = vadd.f32 %v404, %v452
  %v454 = vpop.f32.mrb[0].mxu0
  %455 = vdwg.mxu0
  %v456 = vmax.f32 %v442, 0.0
  %v457 = vmax.f32 %v445, 0.0
  %v458 = vmax.f32 %v450, 0.0
  %v459 = vmax.f32 %v453, 0.0
  %v460 = vmax.f32 %v309, %v456
  %v461 = vmax.f32 %v310, %v457
  %v462 = vmax.f32 %v311, %v458
  %v463 = vmax.f32 %v312, %v459
  %s464 = scalar_lea.vmem %s0, 96
  %v465 = vld [vmem:[%s464] sm:$0xff]
  %v466 = vld [vmem:[%s464 + $0x8] sm:$0xf]
  %v467 = vld [vmem:[%s464 + $0xc] sm:$0xff]
  %v468 = vld [vmem:[%s464 + $0x14] sm:$0xf]
  %v469 = vld [vmem:[%s464 + $0x18] sm:$0xff]
  %v470 = vld [vmem:[%s464 + $0x20] sm:$0xf]
  %v471 = vld [vmem:[%s464 + $0x24] sm:$0xff]
  %v472 = vld [vmem:[%s464 + $0x2c] sm:$0xf]
  %v481 = vunpack.c.l.b16 %v465
  %v482 = vunpack.c.h.b16 %v465
  %v483 = vunpack.c.l.b16 %v466
  %v484 = vunpack.c.l.b16 %v467
  %v485 = vunpack.c.h.b16 %v467
  %v486 = vunpack.c.l.b16 %v468
  %v487 = vunpack.c.l.b16 %v469
  %v488 = vunpack.c.h.b16 %v469
  %v489 = vunpack.c.l.b16 %v470
  %v490 = vunpack.c.l.b16 %v471
  %v491 = vunpack.c.h.b16 %v471
  %v492 = vunpack.c.l.b16 %v472
  %v493 = vpack.c.b16 %v484, %v481
  %v494 = vpack.c.b16 %v485, %v482
  %v495 = vpack.c.b16 %v486, %v483
  %v496 = vpack.c.b16 %v490, %v487
  %v497 = vpack.c.b16 %v491, %v488
  %v498 = vpack.c.b16 %v492, %v489
  %v504 = vsel %vm204, %v495, 0
  %v507 = vsel %vm204, %v498, 0
  %509 = vmatprep.subr.bf16.mxu0 0
  %510 = vmatpush1.bf16.msra.mxu0 %v168
  %511 = vmatprep.subr.bf16.mxu0 0
  %512 = vmatpush1.bf16.msra.mxu0 %v169
  %513 = vmatprep.subr.bf16.mxu0 0
  %514 = vmatpush1.bf16.msra.mxu0 %v170
  %515 = vmatprep.subr.bf16.mxu0 0
  %516 = vmatpush1.bf16.msra.mxu0 %v171
  %517 = vmatprep.subr.bf16.mxu0 0
  %518 = vmatpush1.bf16.msra.mxu0 %v172
  %519 = vmatprep.subr.bf16.mxu0 0
  %520 = vmatpush1.bf16.msra.mxu0 %v173
  %521 = vmatprep.subr.bf16.mxu0 0
  %522 = vmatpush1.bf16.msra.mxu0 %v174
  %523 = vmatprep.subr.bf16.mxu0 0
  %524 = vmatpush1.bf16.msra.mxu0 %v175
  %525 = vmatprep.subr.bf16.mxu0 0
  %526 = vmatpush1.bf16.msra.mxu0 %v176
  %527 = vmatprep.subr.bf16.mxu0 0
  %528 = vmatpush1.bf16.msra.mxu0 %v177
  %529 = vmatprep.subr.bf16.mxu0 0
  %530 = vmatpush1.bf16.msra.mxu0 %v178
  %531 = vmatprep.subr.bf16.mxu0 0
  %532 = vmatpush1.bf16.msra.mxu0 %v179
  %533 = vmatprep.subr.bf16.mxu0 0
  %534 = vmatpush1.bf16.msra.mxu0 %v180
  %535 = vmatprep.subr.bf16.mxu0 0
  %536 = vmatpush1.bf16.msra.mxu0 %v181
  %537 = vmatprep.subr.bf16.mxu0 0
  %538 = vmatpush1.bf16.msra.mxu0 %v182
  %539 = vmatprep.subr.bf16.mxu0 0
  %540 = vmatpush1.bf16.msra.mxu0 %v183
  %541 = vmatprep.mubr.bf16.mxu0 %v494
  %542 = vmatmul.mubr.bf16.gmra.mrb[0].mxu0 %v493
  %v543 = vpop.f32.mrb[0].mxu0
  %v544 = vadd.f32 %v64, %v543
  %v545 = vpop.f32.mrb[0].mxu0
  %v546 = vpop.f32.mrb[0].mxu0
  %v547 = vadd.f32 %v64, %v546
  %v548 = vpop.f32.mrb[0].mxu0
  %549 = vmatprep.mubr.bf16.mxu0 %v497
  %550 = vmatmul.mubr.bf16.gmra.mrb[0].mxu0 %v496
  %v551 = vpop.f32.mrb[0].mxu0
  %v552 = vadd.f32 %v64, %v551
  %v553 = vpop.f32.mrb[0].mxu0
  %v554 = vpop.f32.mrb[0].mxu0
  %v555 = vadd.f32 %v64, %v554
  %v556 = vpop.f32.mrb[0].mxu0
  %557 = vdwg.mxu0
  %558 = vmatprep.subr.bf16.mxu0 0
  %559 = vmatpush1.bf16.msra.mxu0 %v184
  %560 = vmatprep.subr.bf16.mxu0 0
  %561 = vmatpush1.bf16.msra.mxu0 %v185
  %562 = vmatprep.subr.bf16.mxu0 0
  %563 = vmatpush1.bf16.msra.mxu0 0
  %564 = vmatprep.subr.bf16.mxu0 0
  %565 = vmatpush1.bf16.msra.mxu0 0
  %566 = vmatprep.subr.bf16.mxu0 0
  %567 = vmatpush1.bf16.msra.mxu0 0
  %568 = vmatprep.subr.bf16.mxu0 0
  %569 = vmatpush1.bf16.msra.mxu0 0
  %570 = vmatprep.subr.bf16.mxu0 0
  %571 = vmatpush1.bf16.msra.mxu0 0
  %572 = vmatprep.subr.bf16.mxu0 0
  %573 = vmatpush1.bf16.msra.mxu0 0
  %574 = vmatprep.subr.bf16.mxu0 0
  %575 = vmatpush1.bf16.msra.mxu0 0
  %576 = vmatprep.subr.bf16.mxu0 0
  %577 = vmatpush1.bf16.msra.mxu0 0
  %578 = vmatprep.subr.bf16.mxu0 0
  %579 = vmatpush1.bf16.msra.mxu0 0
  %580 = vmatprep.subr.bf16.mxu0 0
  %581 = vmatpush1.bf16.msra.mxu0 0
  %582 = vmatprep.subr.bf16.mxu0 0
  %583 = vmatpush1.bf16.msra.mxu0 0
  %584 = vmatprep.subr.bf16.mxu0 0
  %585 = vmatpush1.bf16.msra.mxu0 0
  %586 = vmatprep.subr.bf16.mxu0 0
  %587 = vmatpush1.bf16.msra.mxu0 0
  %588 = vmatprep.subr.bf16.mxu0 0
  %589 = vmatpush1.bf16.msra.mxu0 0
  %590 = vmatprep.mubr.bf16.mxu0 0
  %591 = vmatmul.mubr.bf16.gmra.mrb[0].mxu0 %v504
  %v592 = vpop.f32.mrb[0].mxu0
  %v593 = vadd.f32 %v544, %v592
  %v594 = vpop.f32.mrb[0].mxu0
  %v595 = vpop.f32.mrb[0].mxu0
  %v596 = vadd.f32 %v547, %v595
  %v597 = vpop.f32.mrb[0].mxu0
  %598 = vmatprep.mubr.bf16.mxu0 0
  %599 = vmatmul.mubr.bf16.gmra.mrb[0].mxu0 %v507
  %v600 = vpop.f32.mrb[0].mxu0
  %v601 = vadd.f32 %v552, %v600
  %v602 = vpop.f32.mrb[0].mxu0
  %v603 = vpop.f32.mrb[0].mxu0
  %v604 = vadd.f32 %v555, %v603
  %v605 = vpop.f32.mrb[0].mxu0
  %606 = vdwg.mxu0
  %v607 = vmax.f32 %v593, 0.0
  %v608 = vmax.f32 %v596, 0.0
  %v609 = vmax.f32 %v601, 0.0
  %v610 = vmax.f32 %v604, 0.0
  %s611 = scalar_lea.vmem %s0, 144
  %v612 = vld [vmem:[%s611] sm:$0xff]
  %v613 = vld [vmem:[%s611 + $0x8] sm:$0xf]
  %v614 = vld [vmem:[%s611 + $0xc] sm:$0xff]
  %v615 = vld [vmem:[%s611 + $0x14] sm:$0xf]
  %v616 = vld [vmem:[%s611 + $0x18] sm:$0xff]
  %v617 = vld [vmem:[%s611 + $0x20] sm:$0xf]
  %v618 = vld [vmem:[%s611 + $0x24] sm:$0xff]
  %v619 = vld [vmem:[%s611 + $0x2c] sm:$0xf]
  %v628 = vunpack.c.l.b16 %v612
  %v629 = vunpack.c.h.b16 %v612
  %v630 = vunpack.c.l.b16 %v613
  %v631 = vunpack.c.l.b16 %v614
  %v632 = vunpack.c.h.b16 %v614
  %v633 = vunpack.c.l.b16 %v615
  %v634 = vunpack.c.l.b16 %v616
  %v635 = vunpack.c.h.b16 %v616
  %v636 = vunpack.c.l.b16 %v617
  %v637 = vunpack.c.l.b16 %v618
  %v638 = vunpack.c.h.b16 %v618
  %v639 = vunpack.c.l.b16 %v619
  %v640 = vpack.c.b16 %v631, %v628
  %v641 = vpack.c.b16 %v632, %v629
  %v642 = vpack.c.b16 %v633, %v630
  %v643 = vpack.c.b16 %v637, %v634
  %v644 = vpack.c.b16 %v638, %v635
  %v645 = vpack.c.b16 %v639, %v636
  %v651 = vsel %vm204, %v642, 0
  %v654 = vsel %vm204, %v645, 0
  %656 = vmatprep.subr.bf16.mxu0 0
  %657 = vmatpush1.bf16.msra.mxu0 %v168
  %658 = vmatprep.subr.bf16.mxu0 0
  %659 = vmatpush1.bf16.msra.mxu0 %v169
  %660 = vmatprep.subr.bf16.mxu0 0
  %661 = vmatpush1.bf16.msra.mxu0 %v170
  %662 = vmatprep.subr.bf16.mxu0 0
  %663 = vmatpush1.bf16.msra.mxu0 %v171
  %664 = vmatprep.subr.bf16.mxu0 0
  %665 = vmatpush1.bf16.msra.mxu0 %v172
  %666 = vmatprep.subr.bf16.mxu0 0
  %667 = vmatpush1.bf16.msra.mxu0 %v173
  %668 = vmatprep.subr.bf16.mxu0 0
  %669 = vmatpush1.bf16.msra.mxu0 %v174
  %670 = vmatprep.subr.bf16.mxu0 0
  %671 = vmatpush1.bf16.msra.mxu0 %v175
  %672 = vmatprep.subr.bf16.mxu0 0
  %673 = vmatpush1.bf16.msra.mxu0 %v176
  %674 = vmatprep.subr.bf16.mxu0 0
  %675 = vmatpush1.bf16.msra.mxu0 %v177
  %676 = vmatprep.subr.bf16.mxu0 0
  %677 = vmatpush1.bf16.msra.mxu0 %v178
  %678 = vmatprep.subr.bf16.mxu0 0
  %679 = vmatpush1.bf16.msra.mxu0 %v179
  %680 = vmatprep.subr.bf16.mxu0 0
  %681 = vmatpush1.bf16.msra.mxu0 %v180
  %682 = vmatprep.subr.bf16.mxu0 0
  %683 = vmatpush1.bf16.msra.mxu0 %v181
  %684 = vmatprep.subr.bf16.mxu0 0
  %685 = vmatpush1.bf16.msra.mxu0 %v182
  %686 = vmatprep.subr.bf16.mxu0 0
  %687 = vmatpush1.bf16.msra.mxu0 %v183
  %688 = vmatprep.mubr.bf16.mxu0 %v641
  %689 = vmatmul.mubr.bf16.gmra.mrb[0].mxu0 %v640
  %v690 = vpop.f32.mrb[0].mxu0
  %v691 = vadd.f32 %v64, %v690
  %v692 = vpop.f32.mrb[0].mxu0
  %v693 = vpop.f32.mrb[0].mxu0
  %v694 = vadd.f32 %v64, %v693
  %v695 = vpop.f32.mrb[0].mxu0
  %696 = vmatprep.mubr.bf16.mxu0 %v644
  %697 = vmatmul.mubr.bf16.gmra.mrb[0].mxu0 %v643
  %v698 = vpop.f32.mrb[0].mxu0
  %v699 = vadd.f32 %v64, %v698
  %v700 = vpop.f32.mrb[0].mxu0
  %v701 = vpop.f32.mrb[0].mxu0
  %v702 = vadd.f32 %v64, %v701
  %v703 = vpop.f32.mrb[0].mxu0
  %704 = vdwg.mxu0
  %705 = vmatprep.subr.bf16.mxu0 0
  %706 = vmatpush1.bf16.msra.mxu0 %v184
  %707 = vmatprep.subr.bf16.mxu0 0
  %708 = vmatpush1.bf16.msra.mxu0 %v185
  %709 = vmatprep.subr.bf16.mxu0 0
  %710 = vmatpush1.bf16.msra.mxu0 0
  %711 = vmatprep.subr.bf16.mxu0 0
  %712 = vmatpush1.bf16.msra.mxu0 0
  %713 = vmatprep.subr.bf16.mxu0 0
  %714 = vmatpush1.bf16.msra.mxu0 0
  %715 = vmatprep.subr.bf16.mxu0 0
  %716 = vmatpush1.bf16.msra.mxu0 0
  %717 = vmatprep.subr.bf16.mxu0 0
  %718 = vmatpush1.bf16.msra.mxu0 0
  %719 = vmatprep.subr.bf16.mxu0 0
  %720 = vmatpush1.bf16.msra.mxu0 0
  %721 = vmatprep.subr.bf16.mxu0 0
  %722 = vmatpush1.bf16.msra.mxu0 0
  %723 = vmatprep.subr.bf16.mxu0 0
  %724 = vmatpush1.bf16.msra.mxu0 0
  %725 = vmatprep.subr.bf16.mxu0 0
  %726 = vmatpush1.bf16.msra.mxu0 0
  %727 = vmatprep.subr.bf16.mxu0 0
  %728 = vmatpush1.bf16.msra.mxu0 0
  %729 = vmatprep.subr.bf16.mxu0 0
  %730 = vmatpush1.bf16.msra.mxu0 0
  %731 = vmatprep.subr.bf16.mxu0 0
  %732 = vmatpush1.bf16.msra.mxu0 0
  %733 = vmatprep.subr.bf16.mxu0 0
  %734 = vmatpush1.bf16.msra.mxu0 0
  %735 = vmatprep.subr.bf16.mxu0 0
  %736 = vmatpush1.bf16.msra.mxu0 0
  %737 = vmatprep.mubr.bf16.mxu0 0
  %738 = vmatmul.mubr.bf16.gmra.mrb[0].mxu0 %v651
  %v739 = vpop.f32.mrb[0].mxu0
  %v740 = vadd.f32 %v691, %v739
  %v741 = vpop.f32.mrb[0].mxu0
  %v742 = vpop.f32.mrb[0].mxu0
  %v743 = vadd.f32 %v694, %v742
  %v744 = vpop.f32.mrb[0].mxu0
  %745 = vmatprep.mubr.bf16.mxu0 0
  %746 = vmatmul.mubr.bf16.gmra.mrb[0].mxu0 %v654
  %v747 = vpop.f32.mrb[0].mxu0
  %v748 = vadd.f32 %v699, %v747
  %v749 = vpop.f32.mrb[0].mxu0
  %v750 = vpop.f32.mrb[0].mxu0
  %v751 = vadd.f32 %v702, %v750
  %v752 = vpop.f32.mrb[0].mxu0
  %753 = vdwg.mxu0
  %v754 = vmax.f32 %v740, 0.0
  %v755 = vmax.f32 %v743, 0.0
  %v756 = vmax.f32 %v748, 0.0
  %v757 = vmax.f32 %v751, 0.0
  %v758 = vmax.f32 %v607, %v754
  %v759 = vmax.f32 %v608, %v755
  %v760 = vmax.f32 %v609, %v756
  %v761 = vmax.f32 %v610, %v757
  %v762 = vmax.f32 %v460, %v758
  %v763 = vmax.f32 %v461, %v759
  %v764 = vmax.f32 %v462, %v760
  %v765 = vmax.f32 %v463, %v761
  %766 = vst [vmem:[%s3] sm:$0xff] %v762
  %767 = vst [vmem:[%s3 + $0x8] sm:$0xff] %v763
  %768 = vst [vmem:[%s3 + $0x10] sm:$0xff] %v764
  %769 = vst [vmem:[%s3 + $0x18] sm:$0xff] %v765
  // Predicated region
  $region14: #{yolo_forward.4} parent=0 // pred_check
    _
  $region15: #{yolo_forward.4} parent=0 // pred_check_branch
    %771 = sbr.rel (0) target = $region17
  $region16: #{yolo_forward.4} parent=0 // pred_region
    _
  $region17: #{yolo_forward.4} parent=0 // pred_fallthru
    _
  // Predicated region
  $region18: #{yolo_forward.4} parent=0 // pred_check
    _
  $region19: #{yolo_forward.4} parent=0 // pred_check_branch
    %773 = sbr.rel (0) target = $region21
  $region20: #{yolo_forward.4} parent=0 // pred_region
    _
  $region21: #{yolo_forward.4} parent=0 // pred_fallthru
    _

// kernel: yolo_forward.5
$region0: #{yolo_forward.5}
  #allocation0 [shape = 'u32[]', space=smem, size = 0x4, offset = 0x4, fixed_abs, tag = 'smem constant byte address 0x4 - core index']
  #allocation1 [shape = 'u32[144,128]{1,0:T(1,128)}', space=vmem, size = 0x12000, scoped, tag = 'internal scratch']
  %s0 = inlined_call_operand.vmem [shape: bf16[4,8,576], index: 0, kind: input, shape index: {}]
  %s1 = inlined_call_operand.vmem [shape: bf16[576,128], index: 1, kind: input, shape index: {}]
  %s2 = inlined_call_operand.vmem [shape: f32[1,128], index: 2, kind: input, shape index: {}]
  %s3 = inlined_call_operand.vmem [shape: bf16[128,128], index: 3, kind: input, shape index: {}]
  %s4 = inlined_call_operand.vmem [shape: f32[1,128], index: 4, kind: input, shape index: {}]
  %s5 = inlined_call_operand.hbm [shape: f32[8,128], index: 5, kind: output, shape index: {}]
  %s6 = sld [smem:[#allocation0]]
  $region30: #{yolo_forward.5} parent=0
    _
  %s8 = ssub.s32 1, %s6
  %s9 = scalar_select 0, %s8, %s6
  $region1: #{yolo_forward.5} parent=0
    #allocation2 [shape = 'u8[4096]{0}', space=vmem, size = 0x1000, scoped, tag = 'output window, operand 0, single buffered']
    #allocation3 [shape = 's32[1]{0}', space=sflag, size = 0x4, scoped, tag = 'scoped memory for yolo_forward.5']
    %10 = vsyncpa [#allocation3], 0
    // Predicated region
    $region2: #{yolo_forward.5} parent=1 // pred_check
      _
    $region3: #{yolo_forward.5} parent=1 // pred_check_branch
      %12 = sbr.rel (0) target = $region5
    $region4: #{yolo_forward.5} parent=1 // pred_region
      _
    $region5: #{yolo_forward.5} parent=1 // pred_fallthru
      _
    // Predicated region
    $region6: #{yolo_forward.5} parent=1 // pred_check
      _
    $region7: #{yolo_forward.5} parent=1 // pred_check_branch
      %14 = sbr.rel (0) target = $region9
    $region8: #{yolo_forward.5} parent=1 // pred_region
      _
    $region9: #{yolo_forward.5} parent=1 // pred_fallthru
      _
    // Predicated region
    $region10: #{yolo_forward.5} parent=1 // pred_check
      _
    $region11: #{yolo_forward.5} parent=1 // pred_check_branch
      %16 = sbr.rel (0) target = $region13
    $region12: #{yolo_forward.5} parent=1 // pred_region
      _
    $region13: #{yolo_forward.5} parent=1 // pred_fallthru
      _
    // Predicated region
    $region14: #{yolo_forward.5} parent=1 // pred_check
      _
    $region15: #{yolo_forward.5} parent=1 // pred_check_branch
      %18 = sbr.rel (0) target = $region17
    $region16: #{yolo_forward.5} parent=1 // pred_region
      _
    $region17: #{yolo_forward.5} parent=1 // pred_fallthru
      _
    // Predicated region
    $region18: #{yolo_forward.5} parent=1 // pred_check
      _
    $region19: #{yolo_forward.5} parent=1 // pred_check_branch
      %20 = sbr.rel (0) target = $region21
    $region20: #{yolo_forward.5} parent=1 // pred_region
      _
    $region21: #{yolo_forward.5} parent=1 // pred_fallthru
      _
    %v22 = vld [vmem:[%s1] sm:$0xf]
    %v23 = vld [vmem:[%s1 + $0x4] sm:$0xf]
    %v24 = vld [vmem:[%s1 + $0x8] sm:$0xf]
    %v25 = vld [vmem:[%s1 + $0xc] sm:$0xf]
    %v26 = vld [vmem:[%s1 + $0x10] sm:$0xf]
    %v27 = vld [vmem:[%s1 + $0x14] sm:$0xf]
    %v28 = vld [vmem:[%s1 + $0x18] sm:$0xf]
    %v29 = vld [vmem:[%s1 + $0x1c] sm:$0xf]
    %v30 = vld [vmem:[%s1 + $0x20] sm:$0xf]
    %v31 = vld [vmem:[%s1 + $0x24] sm:$0xf]
    %v32 = vld [vmem:[%s1 + $0x28] sm:$0xf]
    %v33 = vld [vmem:[%s1 + $0x2c] sm:$0xf]
    %v34 = vld [vmem:[%s1 + $0x30] sm:$0xf]
    %v35 = vld [vmem:[%s1 + $0x34] sm:$0xf]
    %v36 = vld [vmem:[%s1 + $0x38] sm:$0xf]
    %v37 = vld [vmem:[%s1 + $0x3c] sm:$0xf]
    %v38 = vld [vmem:[%s1 + $0x40] sm:$0xf]
    %v39 = vld [vmem:[%s1 + $0x44] sm:$0xf]
    %v40 = vld [vmem:[%s1 + $0x48] sm:$0xf]
    %v41 = vld [vmem:[%s1 + $0x4c] sm:$0xf]
    %v42 = vld [vmem:[%s1 + $0x50] sm:$0xf]
    %v43 = vld [vmem:[%s1 + $0x54] sm:$0xf]
    %v44 = vld [vmem:[%s1 + $0x58] sm:$0xf]
    %v45 = vld [vmem:[%s1 + $0x5c] sm:$0xf]
    %v46 = vld [vmem:[%s1 + $0x60] sm:$0xf]
    %v47 = vld [vmem:[%s1 + $0x64] sm:$0xf]
    %v48 = vld [vmem:[%s1 + $0x68] sm:$0xf]
    %v49 = vld [vmem:[%s1 + $0x6c] sm:$0xf]
    %v50 = vld [vmem:[%s1 + $0x70] sm:$0xf]
    %v51 = vld [vmem:[%s1 + $0x74] sm:$0xf]
    %v52 = vld [vmem:[%s1 + $0x78] sm:$0xf]
    %v53 = vld [vmem:[%s1 + $0x7c] sm:$0xf]
    %v54 = vld [vmem:[%s1 + $0x80] sm:$0xf]
    %v55 = vld [vmem:[%s1 + $0x84] sm:$0xf]
    %v56 = vld [vmem:[%s1 + $0x88] sm:$0xf]
    %v57 = vld [vmem:[%s1 + $0x8c] sm:$0xf]
    %v58 = vld [vmem:[%s1 + $0x90] sm:$0xf]
    %v59 = vld [vmem:[%s1 + $0x94] sm:$0xf]
    %v60 = vld [vmem:[%s1 + $0x98] sm:$0xf]
    %v61 = vld [vmem:[%s1 + $0x9c] sm:$0xf]
    %v62 = vld [vmem:[%s1 + $0xa0] sm:$0xf]
    %v63 = vld [vmem:[%s1 + $0xa4] sm:$0xf]
    %v64 = vld [vmem:[%s1 + $0xa8] sm:$0xf]
    %v65 = vld [vmem:[%s1 + $0xac] sm:$0xf]
    %v66 = vld [vmem:[%s1 + $0xb0] sm:$0xf]
    %v67 = vld [vmem:[%s1 + $0xb4] sm:$0xf]
    %v68 = vld [vmem:[%s1 + $0xb8] sm:$0xf]
    %v69 = vld [vmem:[%s1 + $0xbc] sm:$0xf]
    %v70 = vld [vmem:[%s1 + $0xc0] sm:$0xf]
    %v71 = vld [vmem:[%s1 + $0xc4] sm:$0xf]
    %v72 = vld [vmem:[%s1 + $0xc8] sm:$0xf]
    %v73 = vld [vmem:[%s1 + $0xcc] sm:$0xf]
    %v74 = vld [vmem:[%s1 + $0xd0] sm:$0xf]
    %v75 = vld [vmem:[%s1 + $0xd4] sm:$0xf]
    %v76 = vld [vmem:[%s1 + $0xd8] sm:$0xf]
    %v77 = vld [vmem:[%s1 + $0xdc] sm:$0xf]
    %v78 = vld [vmem:[%s1 + $0xe0] sm:$0xf]
    %v79 = vld [vmem:[%s1 + $0xe4] sm:$0xf]
    %v80 = vld [vmem:[%s1 + $0xe8] sm:$0xf]
    %v81 = vld [vmem:[%s1 + $0xec] sm:$0xf]
    %v82 = vld [vmem:[%s1 + $0xf0] sm:$0xf]
    %v83 = vld [vmem:[%s1 + $0xf4] sm:$0xf]
    %v84 = vld [vmem:[%s1 + $0xf8] sm:$0xf]
    %v85 = vld [vmem:[%s1 + $0xfc] sm:$0xf]
    %v86 = vld [vmem:[%s1 + $0x100] sm:$0xf]
    %v87 = vld [vmem:[%s1 + $0x104] sm:$0xf]
    %v88 = vld [vmem:[%s1 + $0x108] sm:$0xf]
    %v89 = vld [vmem:[%s1 + $0x10c] sm:$0xf]
    %v90 = vld [vmem:[%s1 + $0x110] sm:$0xf]
    %v91 = vld [vmem:[%s1 + $0x114] sm:$0xf]
    %v92 = vld [vmem:[%s1 + $0x118] sm:$0xf]
    %v93 = vld [vmem:[%s1 + $0x11c] sm:$0xf]
    %v94 = vld [vmem:[%s2] sm:$0x1]
    %v95 = vld [vmem:[%s0] sm:$0xff]
    %v96 = vld [vmem:[%s0 + $0x8] sm:$0xff]
    %v97 = vld [vmem:[%s0 + $0x10] sm:$0xf]
    %v99 = vlaneseq
    %v100 = vshrl.u32 %v99, 7
    %v101 = vsub.s32 0, %v100
    %v102 = vrot.slane %v94, %v101
    %v107 = vunpack.c.l.b16 %v95
    %v108 = vunpack.c.h.b16 %v95
    %v109 = vunpack.c.l.b16 %v96
    %v110 = vunpack.c.h.b16 %v96
    %v111 = vunpack.c.l.b16 %v97
    %v112 = vpack.c.b16 %v107, %v107
    %v113 = vpack.c.b16 %v108, %v108
    %v114 = vpack.c.b16 %v109, %v109
    %v115 = vpack.c.b16 %v110, %v110
    %v116 = vpack.c.b16 %v111, %v111
    %v193 = vunpack.c.l.b16 %v22
    %v194 = vunpack.c.l.b16 %v23
    %v195 = vunpack.c.l.b16 %v24
    %v196 = vunpack.c.l.b16 %v25
    %v197 = vunpack.c.l.b16 %v26
    %v198 = vunpack.c.l.b16 %v27
    %v199 = vunpack.c.l.b16 %v28
    %v200 = vunpack.c.l.b16 %v29
    %v201 = vunpack.c.l.b16 %v30
    %v202 = vunpack.c.l.b16 %v31
    %v203 = vunpack.c.l.b16 %v32
    %v204 = vunpack.c.l.b16 %v33
    %v205 = vunpack.c.l.b16 %v34
    %v206 = vunpack.c.l.b16 %v35
    %v207 = vunpack.c.l.b16 %v36
    %v208 = vunpack.c.l.b16 %v37
    %v209 = vunpack.c.l.b16 %v38
    %v210 = vunpack.c.l.b16 %v39
    %v211 = vunpack.c.l.b16 %v40
    %v212 = vunpack.c.l.b16 %v41
    %v213 = vunpack.c.l.b16 %v42
    %v214 = vunpack.c.l.b16 %v43
    %v215 = vunpack.c.l.b16 %v44
    %v216 = vunpack.c.l.b16 %v45
    %v217 = vunpack.c.l.b16 %v46
    %v218 = vunpack.c.l.b16 %v47
    %v219 = vunpack.c.l.b16 %v48
    %v220 = vunpack.c.l.b16 %v49
    %v221 = vunpack.c.l.b16 %v50
    %v222 = vunpack.c.l.b16 %v51
    %v223 = vunpack.c.l.b16 %v52
    %v224 = vunpack.c.l.b16 %v53
    %v225 = vunpack.c.l.b16 %v54
    %v226 = vunpack.c.l.b16 %v55
    %v227 = vunpack.c.l.b16 %v56
    %v228 = vunpack.c.l.b16 %v57
    %v229 = vunpack.c.l.b16 %v58
    %v230 = vunpack.c.l.b16 %v59
    %v231 = vunpack.c.l.b16 %v60
    %v232 = vunpack.c.l.b16 %v61
    %v233 = vunpack.c.l.b16 %v62
    %v234 = vunpack.c.l.b16 %v63
    %v235 = vunpack.c.l.b16 %v64
    %v236 = vunpack.c.l.b16 %v65
    %v237 = vunpack.c.l.b16 %v66
    %v238 = vunpack.c.l.b16 %v67
    %v239 = vunpack.c.l.b16 %v68
    %v240 = vunpack.c.l.b16 %v69
    %v241 = vunpack.c.l.b16 %v70
    %v242 = vunpack.c.l.b16 %v71
    %v243 = vunpack.c.l.b16 %v72
    %v244 = vunpack.c.l.b16 %v73
    %v245 = vunpack.c.l.b16 %v74
    %v246 = vunpack.c.l.b16 %v75
    %v247 = vunpack.c.l.b16 %v76
    %v248 = vunpack.c.l.b16 %v77
    %v249 = vunpack.c.l.b16 %v78
    %v250 = vunpack.c.l.b16 %v79
    %v251 = vunpack.c.l.b16 %v80
    %v252 = vunpack.c.l.b16 %v81
    %v253 = vunpack.c.l.b16 %v82
    %v254 = vunpack.c.l.b16 %v83
    %v255 = vunpack.c.l.b16 %v84
    %v256 = vunpack.c.l.b16 %v85
    %v257 = vunpack.c.l.b16 %v86
    %v258 = vunpack.c.l.b16 %v87
    %v259 = vunpack.c.l.b16 %v88
    %v260 = vunpack.c.l.b16 %v89
    %v261 = vunpack.c.l.b16 %v90
    %v262 = vunpack.c.l.b16 %v91
    %v263 = vunpack.c.l.b16 %v92
    %v264 = vunpack.c.l.b16 %v93
    %v265 = vpack.c.b16 %v194, %v193
    %v266 = vpack.c.b16 %v196, %v195
    %v267 = vpack.c.b16 %v198, %v197
    %v268 = vpack.c.b16 %v200, %v199
    %v269 = vpack.c.b16 %v202, %v201
    %v270 = vpack.c.b16 %v204, %v203
    %v271 = vpack.c.b16 %v206, %v205
    %v272 = vpack.c.b16 %v208, %v207
    %v273 = vpack.c.b16 %v210, %v209
    %v274 = vpack.c.b16 %v212, %v211
    %v275 = vpack.c.b16 %v214, %v213
    %v276 = vpack.c.b16 %v216, %v215
    %v277 = vpack.c.b16 %v218, %v217
    %v278 = vpack.c.b16 %v220, %v219
    %v279 = vpack.c.b16 %v222, %v221
    %v280 = vpack.c.b16 %v224, %v223
    %v281 = vpack.c.b16 %v226, %v225
    %v282 = vpack.c.b16 %v228, %v227
    %v283 = vpack.c.b16 %v230, %v229
    %v284 = vpack.c.b16 %v232, %v231
    %v285 = vpack.c.b16 %v234, %v233
    %v286 = vpack.c.b16 %v236, %v235
    %v287 = vpack.c.b16 %v238, %v237
    %v288 = vpack.c.b16 %v240, %v239
    %v289 = vpack.c.b16 %v242, %v241
    %v290 = vpack.c.b16 %v244, %v243
    %v291 = vpack.c.b16 %v246, %v245
    %v292 = vpack.c.b16 %v248, %v247
    %v293 = vpack.c.b16 %v250, %v249
    %v294 = vpack.c.b16 %v252, %v251
    %v295 = vpack.c.b16 %v254, %v253
    %v296 = vpack.c.b16 %v256, %v255
    %v297 = vpack.c.b16 %v258, %v257
    %v298 = vpack.c.b16 %v260, %v259
    %v299 = vpack.c.b16 %v262, %v261
    %v300 = vpack.c.b16 %v264, %v263
    %vm337 = vcmask 523264
    %v339 = vsel %vm337, %v116, 0
    %341 = vmatprep.subr.bf16.mxu0 0
    %342 = vmatpush1.bf16.msra.mxu0 %v265
    %343 = vmatprep.subr.bf16.mxu0 0
    %344 = vmatpush1.bf16.msra.mxu0 %v266
    %345 = vmatprep.subr.bf16.mxu0 0
    %346 = vmatpush1.bf16.msra.mxu0 %v267
    %347 = vmatprep.subr.bf16.mxu0 0
    %348 = vmatpush1.bf16.msra.mxu0 %v268
    %349 = vmatprep.subr.bf16.mxu0 0
    %350 = vmatpush1.bf16.msra.mxu0 %v269
    %351 = vmatprep.subr.bf16.mxu0 0
    %352 = vmatpush1.bf16.msra.mxu0 %v270
    %353 = vmatprep.subr.bf16.mxu0 0
    %354 = vmatpush1.bf16.msra.mxu0 %v271
    %355 = vmatprep.subr.bf16.mxu0 0
    %356 = vmatpush1.bf16.msra.mxu0 %v272
    %357 = vmatprep.subr.bf16.mxu0 0
    %358 = vmatpush1.bf16.msra.mxu0 %v273
    %359 = vmatprep.subr.bf16.mxu0 0
    %360 = vmatpush1.bf16.msra.mxu0 %v274
    %361 = vmatprep.subr.bf16.mxu0 0
    %362 = vmatpush1.bf16.msra.mxu0 %v275
    %363 = vmatprep.subr.bf16.mxu0 0
    %364 = vmatpush1.bf16.msra.mxu0 %v276
    %365 = vmatprep.subr.bf16.mxu0 0
    %366 = vmatpush1.bf16.msra.mxu0 %v277
    %367 = vmatprep.subr.bf16.mxu0 0
    %368 = vmatpush1.bf16.msra.mxu0 %v278
    %369 = vmatprep.subr.bf16.mxu0 0
    %370 = vmatpush1.bf16.msra.mxu0 %v279
    %371 = vmatprep.subr.bf16.mxu0 0
    %372 = vmatpush1.bf16.msra.mxu0 %v280
    %373 = vmatprep.mubr.bf16.mxu0 %v113
    %374 = vmatmul.mubr.bf16.gmra.mrb[0].mxu0 %v112
    %v375 = vpop.f32.mrb[0].mxu0
    %v376 = vadd.f32 %v102, %v375
    %v377 = vpop.f32.mrb[0].mxu0
    %v378 = vpop.f32.mrb[0].mxu0
    %v379 = vpop.f32.mrb[0].mxu0
    %380 = vdwg.mxu0
    %381 = vmatprep.subr.bf16.mxu0 0
    %382 = vmatpush1.bf16.msra.mxu0 %v281
    %383 = vmatprep.subr.bf16.mxu0 0
    %384 = vmatpush1.bf16.msra.mxu0 %v282
    %385 = vmatprep.subr.bf16.mxu0 0
    %386 = vmatpush1.bf16.msra.mxu0 %v283
    %387 = vmatprep.subr.bf16.mxu0 0
    %388 = vmatpush1.bf16.msra.mxu0 %v284
    %389 = vmatprep.subr.bf16.mxu0 0
    %390 = vmatpush1.bf16.msra.mxu0 %v285
    %391 = vmatprep.subr.bf16.mxu0 0
    %392 = vmatpush1.bf16.msra.mxu0 %v286
    %393 = vmatprep.subr.bf16.mxu0 0
    %394 = vmatpush1.bf16.msra.mxu0 %v287
    %395 = vmatprep.subr.bf16.mxu0 0
    %396 = vmatpush1.bf16.msra.mxu0 %v288
    %397 = vmatprep.subr.bf16.mxu0 0
    %398 = vmatpush1.bf16.msra.mxu0 %v289
    %399 = vmatprep.subr.bf16.mxu0 0
    %400 = vmatpush1.bf16.msra.mxu0 %v290
    %401 = vmatprep.subr.bf16.mxu0 0
    %402 = vmatpush1.bf16.msra.mxu0 %v291
    %403 = vmatprep.subr.bf16.mxu0 0
    %404 = vmatpush1.bf16.msra.mxu0 %v292
    %405 = vmatprep.subr.bf16.mxu0 0
    %406 = vmatpush1.bf16.msra.mxu0 %v293
    %407 = vmatprep.subr.bf16.mxu0 0
    %408 = vmatpush1.bf16.msra.mxu0 %v294
    %409 = vmatprep.subr.bf16.mxu0 0
    %410 = vmatpush1.bf16.msra.mxu0 %v295
    %411 = vmatprep.subr.bf16.mxu0 0
    %412 = vmatpush1.bf16.msra.mxu0 %v296
    %413 = vmatprep.mubr.bf16.mxu0 %v115
    %414 = vmatmul.mubr.bf16.gmra.mrb[0].mxu0 %v114
    %v415 = vpop.f32.mrb[0].mxu0
    %v416 = vadd.f32 %v376, %v415
    %v417 = vpop.f32.mrb[0].mxu0
    %v418 = vpop.f32.mrb[0].mxu0
    %v419 = vpop.f32.mrb[0].mxu0
    %420 = vdwg.mxu0
    %421 = vmatprep.subr.bf16.mxu0 0
    %422 = vmatpush1.bf16.msra.mxu0 %v297
    %423 = vmatprep.subr.bf16.mxu0 0
    %424 = vmatpush1.bf16.msra.mxu0 %v298
    %425 = vmatprep.subr.bf16.mxu0 0
    %426 = vmatpush1.bf16.msra.mxu0 %v299
    %427 = vmatprep.subr.bf16.mxu0 0
    %428 = vmatpush1.bf16.msra.mxu0 %v300
    %429 = vmatprep.subr.bf16.mxu0 0
    %430 = vmatpush1.bf16.msra.mxu0 0
    %431 = vmatprep.subr.bf16.mxu0 0
    %432 = vmatpush1.bf16.msra.mxu0 0
    %433 = vmatprep.subr.bf16.mxu0 0
    %434 = vmatpush1.bf16.msra.mxu0 0
    %435 = vmatprep.subr.bf16.mxu0 0
    %436 = vmatpush1.bf16.msra.mxu0 0
    %437 = vmatprep.subr.bf16.mxu0 0
    %438 = vmatpush1.bf16.msra.mxu0 0
    %439 = vmatprep.subr.bf16.mxu0 0
    %440 = vmatpush1.bf16.msra.mxu0 0
    %441 = vmatprep.subr.bf16.mxu0 0
    %442 = vmatpush1.bf16.msra.mxu0 0
    %443 = vmatprep.subr.bf16.mxu0 0
    %444 = vmatpush1.bf16.msra.mxu0 0
    %445 = vmatprep.subr.bf16.mxu0 0
    %446 = vmatpush1.bf16.msra.mxu0 0
    %447 = vmatprep.subr.bf16.mxu0 0
    %448 = vmatpush1.bf16.msra.mxu0 0
    %449 = vmatprep.subr.bf16.mxu0 0
    %450 = vmatpush1.bf16.msra.mxu0 0
    %451 = vmatprep.subr.bf16.mxu0 0
    %452 = vmatpush1.bf16.msra.mxu0 0
    %453 = vmatprep.mubr.bf16.mxu0 0
    %454 = vmatmul.mubr.bf16.gmra.mrb[0].mxu0 %v339
    %v455 = vpop.f32.mrb[0].mxu0
    %v456 = vadd.f32 %v416, %v455
    %v457 = vpop.f32.mrb[0].mxu0
    %v458 = vpop.f32.mrb[0].mxu0
    %v459 = vpop.f32.mrb[0].mxu0
    %460 = vdwg.mxu0
    %v461 = vmax.f32 %v456, 0.0
    %s462 = scalar_lea.vmem %s0, 20
    %v463 = vld [vmem:[%s462] sm:$0xff]
    %v464 = vld [vmem:[%s462 + $0x8] sm:$0xff]
    %v465 = vld [vmem:[%s462 + $0x10] sm:$0xf]
    %v469 = vunpack.c.l.b16 %v463
    %v470 = vunpack.c.h.b16 %v463
    %v471 = vunpack.c.l.b16 %v464
    %v472 = vunpack.c.h.b16 %v464
    %v473 = vunpack.c.l.b16 %v465
    %v474 = vpack.c.b16 %v469, %v469
    %v475 = vpack.c.b16 %v470, %v470
    %v476 = vpack.c.b16 %v471, %v471
    %v477 = vpack.c.b16 %v472, %v472
    %v478 = vpack.c.b16 %v473, %v473
    %v484 = vsel %vm337, %v478, 0
    %486 = vmatprep.subr.bf16.mxu0 0
    %487 = vmatpush1.bf16.msra.mxu0 %v265
    %488 = vmatprep.subr.bf16.mxu0 0
    %489 = vmatpush1.bf16.msra.mxu0 %v266
    %490 = vmatprep.subr.bf16.mxu0 0
    %491 = vmatpush1.bf16.msra.mxu0 %v267
    %492 = vmatprep.subr.bf16.mxu0 0
    %493 = vmatpush1.bf16.msra.mxu0 %v268
    %494 = vmatprep.subr.bf16.mxu0 0
    %495 = vmatpush1.bf16.msra.mxu0 %v269
    %496 = vmatprep.subr.bf16.mxu0 0
    %497 = vmatpush1.bf16.msra.mxu0 %v270
    %498 = vmatprep.subr.bf16.mxu0 0
    %499 = vmatpush1.bf16.msra.mxu0 %v271
    %500 = vmatprep.subr.bf16.mxu0 0
    %501 = vmatpush1.bf16.msra.mxu0 %v272
    %502 = vmatprep.subr.bf16.mxu0 0
    %503 = vmatpush1.bf16.msra.mxu0 %v273
    %504 = vmatprep.subr.bf16.mxu0 0
    %505 = vmatpush1.bf16.msra.mxu0 %v274
    %506 = vmatprep.subr.bf16.mxu0 0
    %507 = vmatpush1.bf16.msra.mxu0 %v275
    %508 = vmatprep.subr.bf16.mxu0 0
    %509 = vmatpush1.bf16.msra.mxu0 %v276
    %510 = vmatprep.subr.bf16.mxu0 0
    %511 = vmatpush1.bf16.msra.mxu0 %v277
    %512 = vmatprep.subr.bf16.mxu0 0
    %513 = vmatpush1.bf16.msra.mxu0 %v278
    %514 = vmatprep.subr.bf16.mxu0 0
    %515 = vmatpush1.bf16.msra.mxu0 %v279
    %516 = vmatprep.subr.bf16.mxu0 0
    %517 = vmatpush1.bf16.msra.mxu0 %v280
    %518 = vmatprep.mubr.bf16.mxu0 %v475
    %519 = vmatmul.mubr.bf16.gmra.mrb[0].mxu0 %v474
    %v520 = vpop.f32.mrb[0].mxu0
    %v521 = vadd.f32 %v102, %v520
    %v522 = vpop.f32.mrb[0].mxu0
    %v523 = vpop.f32.mrb[0].mxu0
    %v524 = vpop.f32.mrb[0].mxu0
    %525 = vdwg.mxu0
    %526 = vmatprep.subr.bf16.mxu0 0
    %527 = vmatpush1.bf16.msra.mxu0 %v281
    %528 = vmatprep.subr.bf16.mxu0 0
    %529 = vmatpush1.bf16.msra.mxu0 %v282
    %530 = vmatprep.subr.bf16.mxu0 0
    %531 = vmatpush1.bf16.msra.mxu0 %v283
    %532 = vmatprep.subr.bf16.mxu0 0
    %533 = vmatpush1.bf16.msra.mxu0 %v284
    %534 = vmatprep.subr.bf16.mxu0 0
    %535 = vmatpush1.bf16.msra.mxu0 %v285
    %536 = vmatprep.subr.bf16.mxu0 0
    %537 = vmatpush1.bf16.msra.mxu0 %v286
    %538 = vmatprep.subr.bf16.mxu0 0
    %539 = vmatpush1.bf16.msra.mxu0 %v287
    %540 = vmatprep.subr.bf16.mxu0 0
    %541 = vmatpush1.bf16.msra.mxu0 %v288
    %542 = vmatprep.subr.bf16.mxu0 0
    %543 = vmatpush1.bf16.msra.mxu0 %v289
    %544 = vmatprep.subr.bf16.mxu0 0
    %545 = vmatpush1.bf16.msra.mxu0 %v290
    %546 = vmatprep.subr.bf16.mxu0 0
    %547 = vmatpush1.bf16.msra.mxu0 %v291
    %548 = vmatprep.subr.bf16.mxu0 0
    %549 = vmatpush1.bf16.msra.mxu0 %v292
    %550 = vmatprep.subr.bf16.mxu0 0
    %551 = vmatpush1.bf16.msra.mxu0 %v293
    %552 = vmatprep.subr.bf16.mxu0 0
    %553 = vmatpush1.bf16.msra.mxu0 %v294
    %554 = vmatprep.subr.bf16.mxu0 0
    %555 = vmatpush1.bf16.msra.mxu0 %v295
    %556 = vmatprep.subr.bf16.mxu0 0
    %557 = vmatpush1.bf16.msra.mxu0 %v296
    %558 = vmatprep.mubr.bf16.mxu0 %v477
    %559 = vmatmul.mubr.bf16.gmra.mrb[0].mxu0 %v476
    %v560 = vpop.f32.mrb[0].mxu0
    %v561 = vadd.f32 %v521, %v560
    %v562 = vpop.f32.mrb[0].mxu0
    %v563 = vpop.f32.mrb[0].mxu0
    %v564 = vpop.f32.mrb[0].mxu0
    %565 = vdwg.mxu0
    %566 = vmatprep.subr.bf16.mxu0 0
    %567 = vmatpush1.bf16.msra.mxu0 %v297
    %568 = vmatprep.subr.bf16.mxu0 0
    %569 = vmatpush1.bf16.msra.mxu0 %v298
    %570 = vmatprep.subr.bf16.mxu0 0
    %571 = vmatpush1.bf16.msra.mxu0 %v299
    %572 = vmatprep.subr.bf16.mxu0 0
    %573 = vmatpush1.bf16.msra.mxu0 %v300
    %574 = vmatprep.subr.bf16.mxu0 0
    %575 = vmatpush1.bf16.msra.mxu0 0
    %576 = vmatprep.subr.bf16.mxu0 0
    %577 = vmatpush1.bf16.msra.mxu0 0
    %578 = vmatprep.subr.bf16.mxu0 0
    %579 = vmatpush1.bf16.msra.mxu0 0
    %580 = vmatprep.subr.bf16.mxu0 0
    %581 = vmatpush1.bf16.msra.mxu0 0
    %582 = vmatprep.subr.bf16.mxu0 0
    %583 = vmatpush1.bf16.msra.mxu0 0
    %584 = vmatprep.subr.bf16.mxu0 0
    %585 = vmatpush1.bf16.msra.mxu0 0
    %586 = vmatprep.subr.bf16.mxu0 0
    %587 = vmatpush1.bf16.msra.mxu0 0
    %588 = vmatprep.subr.bf16.mxu0 0
    %589 = vmatpush1.bf16.msra.mxu0 0
    %590 = vmatprep.subr.bf16.mxu0 0
    %591 = vmatpush1.bf16.msra.mxu0 0
    %592 = vmatprep.subr.bf16.mxu0 0
    %593 = vmatpush1.bf16.msra.mxu0 0
    %594 = vmatprep.subr.bf16.mxu0 0
    %595 = vmatpush1.bf16.msra.mxu0 0
    %596 = vmatprep.subr.bf16.mxu0 0
    %597 = vmatpush1.bf16.msra.mxu0 0
    %598 = vmatprep.mubr.bf16.mxu0 0
    %599 = vmatmul.mubr.bf16.gmra.mrb[0].mxu0 %v484
    %v600 = vpop.f32.mrb[0].mxu0
    %v601 = vadd.f32 %v561, %v600
    %v602 = vpop.f32.mrb[0].mxu0
    %v603 = vpop.f32.mrb[0].mxu0
    %v604 = vpop.f32.mrb[0].mxu0
    %605 = vdwg.mxu0
    %v606 = vmax.f32 %v601, 0.0
    %v607 = vmax.f32 %v461, %v606
    %s608 = scalar_lea.vmem %s0, 40
    %v609 = vld [vmem:[%s608] sm:$0xff]
    %v610 = vld [vmem:[%s608 + $0x8] sm:$0xff]
    %v611 = vld [vmem:[%s608 + $0x10] sm:$0xf]
    %v615 = vunpack.c.l.b16 %v609
    %v616 = vunpack.c.h.b16 %v609
    %v617 = vunpack.c.l.b16 %v610
    %v618 = vunpack.c.h.b16 %v610
    %v619 = vunpack.c.l.b16 %v611
    %v620 = vpack.c.b16 %v615, %v615
    %v621 = vpack.c.b16 %v616, %v616
    %v622 = vpack.c.b16 %v617, %v617
    %v623 = vpack.c.b16 %v618, %v618
    %v624 = vpack.c.b16 %v619, %v619
    %v630 = vsel %vm337, %v624, 0
    %632 = vmatprep.subr.bf16.mxu0 0
    %633 = vmatpush1.bf16.msra.mxu0 %v265
    %634 = vmatprep.subr.bf16.mxu0 0
    %635 = vmatpush1.bf16.msra.mxu0 %v266
    %636 = vmatprep.subr.bf16.mxu0 0
    %637 = vmatpush1.bf16.msra.mxu0 %v267
    %638 = vmatprep.subr.bf16.mxu0 0
    %639 = vmatpush1.bf16.msra.mxu0 %v268
    %640 = vmatprep.subr.bf16.mxu0 0
    %641 = vmatpush1.bf16.msra.mxu0 %v269
    %642 = vmatprep.subr.bf16.mxu0 0
    %643 = vmatpush1.bf16.msra.mxu0 %v270
    %644 = vmatprep.subr.bf16.mxu0 0
    %645 = vmatpush1.bf16.msra.mxu0 %v271
    %646 = vmatprep.subr.bf16.mxu0 0
    %647 = vmatpush1.bf16.msra.mxu0 %v272
    %648 = vmatprep.subr.bf16.mxu0 0
    %649 = vmatpush1.bf16.msra.mxu0 %v273
    %650 = vmatprep.subr.bf16.mxu0 0
    %651 = vmatpush1.bf16.msra.mxu0 %v274
    %652 = vmatprep.subr.bf16.mxu0 0
    %653 = vmatpush1.bf16.msra.mxu0 %v275
    %654 = vmatprep.subr.bf16.mxu0 0
    %655 = vmatpush1.bf16.msra.mxu0 %v276
    %656 = vmatprep.subr.bf16.mxu0 0
    %657 = vmatpush1.bf16.msra.mxu0 %v277
    %658 = vmatprep.subr.bf16.mxu0 0
    %659 = vmatpush1.bf16.msra.mxu0 %v278
    %660 = vmatprep.subr.bf16.mxu0 0
    %661 = vmatpush1.bf16.msra.mxu0 %v279
    %662 = vmatprep.subr.bf16.mxu0 0
    %663 = vmatpush1.bf16.msra.mxu0 %v280
    %664 = vmatprep.mubr.bf16.mxu0 %v621
    %665 = vmatmul.mubr.bf16.gmra.mrb[0].mxu0 %v620
    %v666 = vpop.f32.mrb[0].mxu0
    %v667 = vadd.f32 %v102, %v666
    %v668 = vpop.f32.mrb[0].mxu0
    %v669 = vpop.f32.mrb[0].mxu0
    %v670 = vpop.f32.mrb[0].mxu0
    %671 = vdwg.mxu0
    %672 = vmatprep.subr.bf16.mxu0 0
    %673 = vmatpush1.bf16.msra.mxu0 %v281
    %674 = vmatprep.subr.bf16.mxu0 0
    %675 = vmatpush1.bf16.msra.mxu0 %v282
    %676 = vmatprep.subr.bf16.mxu0 0
    %677 = vmatpush1.bf16.msra.mxu0 %v283
    %678 = vmatprep.subr.bf16.mxu0 0
    %679 = vmatpush1.bf16.msra.mxu0 %v284
    %680 = vmatprep.subr.bf16.mxu0 0
    %681 = vmatpush1.bf16.msra.mxu0 %v285
    %682 = vmatprep.subr.bf16.mxu0 0
    %683 = vmatpush1.bf16.msra.mxu0 %v286
    %684 = vmatprep.subr.bf16.mxu0 0
    %685 = vmatpush1.bf16.msra.mxu0 %v287
    %686 = vmatprep.subr.bf16.mxu0 0
    %687 = vmatpush1.bf16.msra.mxu0 %v288
    %688 = vmatprep.subr.bf16.mxu0 0
    %689 = vmatpush1.bf16.msra.mxu0 %v289
    %690 = vmatprep.subr.bf16.mxu0 0
    %691 = vmatpush1.bf16.msra.mxu0 %v290
    %692 = vmatprep.subr.bf16.mxu0 0
    %693 = vmatpush1.bf16.msra.mxu0 %v291
    %694 = vmatprep.subr.bf16.mxu0 0
    %695 = vmatpush1.bf16.msra.mxu0 %v292
    %696 = vmatprep.subr.bf16.mxu0 0
    %697 = vmatpush1.bf16.msra.mxu0 %v293
    %698 = vmatprep.subr.bf16.mxu0 0
    %699 = vmatpush1.bf16.msra.mxu0 %v294
    %700 = vmatprep.subr.bf16.mxu0 0
    %701 = vmatpush1.bf16.msra.mxu0 %v295
    %702 = vmatprep.subr.bf16.mxu0 0
    %703 = vmatpush1.bf16.msra.mxu0 %v296
    %704 = vmatprep.mubr.bf16.mxu0 %v623
    %705 = vmatmul.mubr.bf16.gmra.mrb[0].mxu0 %v622
    %v706 = vpop.f32.mrb[0].mxu0
    %v707 = vadd.f32 %v667, %v706
    %v708 = vpop.f32.mrb[0].mxu0
    %v709 = vpop.f32.mrb[0].mxu0
    %v710 = vpop.f32.mrb[0].mxu0
    %711 = vdwg.mxu0
    %712 = vmatprep.subr.bf16.mxu0 0
    %713 = vmatpush1.bf16.msra.mxu0 %v297
    %714 = vmatprep.subr.bf16.mxu0 0
    %715 = vmatpush1.bf16.msra.mxu0 %v298
    %716 = vmatprep.subr.bf16.mxu0 0
    %717 = vmatpush1.bf16.msra.mxu0 %v299
    %718 = vmatprep.subr.bf16.mxu0 0
    %719 = vmatpush1.bf16.msra.mxu0 %v300
    %720 = vmatprep.subr.bf16.mxu0 0
    %721 = vmatpush1.bf16.msra.mxu0 0
    %722 = vmatprep.subr.bf16.mxu0 0
    %723 = vmatpush1.bf16.msra.mxu0 0
    %724 = vmatprep.subr.bf16.mxu0 0
    %725 = vmatpush1.bf16.msra.mxu0 0
    %726 = vmatprep.subr.bf16.mxu0 0
    %727 = vmatpush1.bf16.msra.mxu0 0
    %728 = vmatprep.subr.bf16.mxu0 0
    %729 = vmatpush1.bf16.msra.mxu0 0
    %730 = vmatprep.subr.bf16.mxu0 0
    %731 = vmatpush1.bf16.msra.mxu0 0
    %732 = vmatprep.subr.bf16.mxu0 0
    %733 = vmatpush1.bf16.msra.mxu0 0
    %734 = vmatprep.subr.bf16.mxu0 0
    %735 = vmatpush1.bf16.msra.mxu0 0
    %736 = vmatprep.subr.bf16.mxu0 0
    %737 = vmatpush1.bf16.msra.mxu0 0
    %738 = vmatprep.subr.bf16.mxu0 0
    %739 = vmatpush1.bf16.msra.mxu0 0
    %740 = vmatprep.subr.bf16.mxu0 0
    %741 = vmatpush1.bf16.msra.mxu0 0
    %742 = vmatprep.subr.bf16.mxu0 0
    %743 = vmatpush1.bf16.msra.mxu0 0
    %744 = vmatprep.mubr.bf16.mxu0 0
    %745 = vmatmul.mubr.bf16.gmra.mrb[0].mxu0 %v630
    %v746 = vpop.f32.mrb[0].mxu0
    %v747 = vadd.f32 %v707, %v746
    %v748 = vpop.f32.mrb[0].mxu0
    %v749 = vpop.f32.mrb[0].mxu0
    %v750 = vpop.f32.mrb[0].mxu0
    %751 = vdwg.mxu0
    %v752 = vmax.f32 %v747, 0.0
    %s753 = scalar_lea.vmem %s0, 60
    %v754 = vld [vmem:[%s753] sm:$0xff]
    %v755 = vld [vmem:[%s753 + $0x8] sm:$0xff]
    %v756 = vld [vmem:[%s753 + $0x10] sm:$0xf]
    %v760 = vunpack.c.l.b16 %v754
    %v761 = vunpack.c.h.b16 %v754
    %v762 = vunpack.c.l.b16 %v755
    %v763 = vunpack.c.h.b16 %v755
    %v764 = vunpack.c.l.b16 %v756
    %v765 = vpack.c.b16 %v760, %v760
    %v766 = vpack.c.b16 %v761, %v761
    %v767 = vpack.c.b16 %v762, %v762
    %v768 = vpack.c.b16 %v763, %v763
    %v769 = vpack.c.b16 %v764, %v764
    %v775 = vsel %vm337, %v769, 0
    %777 = vmatprep.subr.bf16.mxu0 0
    %778 = vmatpush1.bf16.msra.mxu0 %v265
    %779 = vmatprep.subr.bf16.mxu0 0
    %780 = vmatpush1.bf16.msra.mxu0 %v266
    %781 = vmatprep.subr.bf16.mxu0 0
    %782 = vmatpush1.bf16.msra.mxu0 %v267
    %783 = vmatprep.subr.bf16.mxu0 0
    %784 = vmatpush1.bf16.msra.mxu0 %v268
    %785 = vmatprep.subr.bf16.mxu0 0
    %786 = vmatpush1.bf16.msra.mxu0 %v269
    %787 = vmatprep.subr.bf16.mxu0 0
    %788 = vmatpush1.bf16.msra.mxu0 %v270
    %789 = vmatprep.subr.bf16.mxu0 0
    %790 = vmatpush1.bf16.msra.mxu0 %v271
    %791 = vmatprep.subr.bf16.mxu0 0
    %792 = vmatpush1.bf16.msra.mxu0 %v272
    %793 = vmatprep.subr.bf16.mxu0 0
    %794 = vmatpush1.bf16.msra.mxu0 %v273
    %795 = vmatprep.subr.bf16.mxu0 0
    %796 = vmatpush1.bf16.msra.mxu0 %v274
    %797 = vmatprep.subr.bf16.mxu0 0
    %798 = vmatpush1.bf16.msra.mxu0 %v275
    %799 = vmatprep.subr.bf16.mxu0 0
    %800 = vmatpush1.bf16.msra.mxu0 %v276
    %801 = vmatprep.subr.bf16.mxu0 0
    %802 = vmatpush1.bf16.msra.mxu0 %v277
    %803 = vmatprep.subr.bf16.mxu0 0
    %804 = vmatpush1.bf16.msra.mxu0 %v278
    %805 = vmatprep.subr.bf16.mxu0 0
    %806 = vmatpush1.bf16.msra.mxu0 %v279
    %807 = vmatprep.subr.bf16.mxu0 0
    %808 = vmatpush1.bf16.msra.mxu0 %v280
    %809 = vmatprep.mubr.bf16.mxu0 %v766
    %810 = vmatmul.mubr.bf16.gmra.mrb[0].mxu0 %v765
    %v811 = vpop.f32.mrb[0].mxu0
    %v812 = vadd.f32 %v102, %v811
    %v813 = vpop.f32.mrb[0].mxu0
    %v814 = vpop.f32.mrb[0].mxu0
    %v815 = vpop.f32.mrb[0].mxu0
    %816 = vdwg.mxu0
    %817 = vmatprep.subr.bf16.mxu0 0
    %818 = vmatpush1.bf16.msra.mxu0 %v281
    %819 = vmatprep.subr.bf16.mxu0 0
    %820 = vmatpush1.bf16.msra.mxu0 %v282
    %821 = vmatprep.subr.bf16.mxu0 0
    %822 = vmatpush1.bf16.msra.mxu0 %v283
    %823 = vmatprep.subr.bf16.mxu0 0
    %824 = vmatpush1.bf16.msra.mxu0 %v284
    %825 = vmatprep.subr.bf16.mxu0 0
    %826 = vmatpush1.bf16.msra.mxu0 %v285
    %827 = vmatprep.subr.bf16.mxu0 0
    %828 = vmatpush1.bf16.msra.mxu0 %v286
    %829 = vmatprep.subr.bf16.mxu0 0
    %830 = vmatpush1.bf16.msra.mxu0 %v287
    %831 = vmatprep.subr.bf16.mxu0 0
    %832 = vmatpush1.bf16.msra.mxu0 %v288
    %833 = vmatprep.subr.bf16.mxu0 0
    %834 = vmatpush1.bf16.msra.mxu0 %v289
    %835 = vmatprep.subr.bf16.mxu0 0
    %836 = vmatpush1.bf16.msra.mxu0 %v290
    %837 = vmatprep.subr.bf16.mxu0 0
    %838 = vmatpush1.bf16.msra.mxu0 %v291
    %839 = vmatprep.subr.bf16.mxu0 0
    %840 = vmatpush1.bf16.msra.mxu0 %v292
    %841 = vmatprep.subr.bf16.mxu0 0
    %842 = vmatpush1.bf16.msra.mxu0 %v293
    %843 = vmatprep.subr.bf16.mxu0 0
    %844 = vmatpush1.bf16.msra.mxu0 %v294
    %845 = vmatprep.subr.bf16.mxu0 0
    %846 = vmatpush1.bf16.msra.mxu0 %v295
    %847 = vmatprep.subr.bf16.mxu0 0
    %848 = vmatpush1.bf16.msra.mxu0 %v296
    %849 = vmatprep.mubr.bf16.mxu0 %v768
    %850 = vmatmul.mubr.bf16.gmra.mrb[0].mxu0 %v767
    %v851 = vpop.f32.mrb[0].mxu0
    %v852 = vadd.f32 %v812, %v851
    %v853 = vpop.f32.mrb[0].mxu0
    %v854 = vpop.f32.mrb[0].mxu0
    %v855 = vpop.f32.mrb[0].mxu0
    %856 = vdwg.mxu0
    %857 = vmatprep.subr.bf16.mxu0 0
    %858 = vmatpush1.bf16.msra.mxu0 %v297
    %859 = vmatprep.subr.bf16.mxu0 0
    %860 = vmatpush1.bf16.msra.mxu0 %v298
    %861 = vmatprep.subr.bf16.mxu0 0
    %862 = vmatpush1.bf16.msra.mxu0 %v299
    %863 = vmatprep.subr.bf16.mxu0 0
    %864 = vmatpush1.bf16.msra.mxu0 %v300
    %865 = vmatprep.subr.bf16.mxu0 0
    %866 = vmatpush1.bf16.msra.mxu0 0
    %867 = vmatprep.subr.bf16.mxu0 0
    %868 = vmatpush1.bf16.msra.mxu0 0
    %869 = vmatprep.subr.bf16.mxu0 0
    %870 = vmatpush1.bf16.msra.mxu0 0
    %871 = vmatprep.subr.bf16.mxu0 0
    %872 = vmatpush1.bf16.msra.mxu0 0
    %873 = vmatprep.subr.bf16.mxu0 0
    %874 = vmatpush1.bf16.msra.mxu0 0
    %875 = vmatprep.subr.bf16.mxu0 0
    %876 = vmatpush1.bf16.msra.mxu0 0
    %877 = vmatprep.subr.bf16.mxu0 0
    %878 = vmatpush1.bf16.msra.mxu0 0
    %879 = vmatprep.subr.bf16.mxu0 0
    %880 = vmatpush1.bf16.msra.mxu0 0
    %881 = vmatprep.subr.bf16.mxu0 0
    %882 = vmatpush1.bf16.msra.mxu0 0
    %883 = vmatprep.subr.bf16.mxu0 0
    %884 = vmatpush1.bf16.msra.mxu0 0
    %885 = vmatprep.subr.bf16.mxu0 0
    %886 = vmatpush1.bf16.msra.mxu0 0
    %887 = vmatprep.subr.bf16.mxu0 0
    %888 = vmatpush1.bf16.msra.mxu0 0
    %889 = vmatprep.mubr.bf16.mxu0 0
    %890 = vmatmul.mubr.bf16.gmra.mrb[0].mxu0 %v775
    %v891 = vpop.f32.mrb[0].mxu0
    %v892 = vadd.f32 %v852, %v891
    %v893 = vpop.f32.mrb[0].mxu0
    %v894 = vpop.f32.mrb[0].mxu0
    %v895 = vpop.f32.mrb[0].mxu0
    %896 = vdwg.mxu0
    %v897 = vmax.f32 %v892, 0.0
    %v898 = vmax.f32 %v752, %v897
    %v899 = vmax.f32 %v607, %v898
    %v900 = vpack.c.bf16 %v899, %v899
    %v901 = vld [vmem:[%s3] sm:$0xf]
    %v902 = vld [vmem:[%s3 + $0x4] sm:$0xf]
    %v903 = vld [vmem:[%s3 + $0x8] sm:$0xf]
    %v904 = vld [vmem:[%s3 + $0xc] sm:$0xf]
    %v905 = vld [vmem:[%s3 + $0x10] sm:$0xf]
    %v906 = vld [vmem:[%s3 + $0x14] sm:$0xf]
    %v907 = vld [vmem:[%s3 + $0x18] sm:$0xf]
    %v908 = vld [vmem:[%s3 + $0x1c] sm:$0xf]
    %v909 = vld [vmem:[%s3 + $0x20] sm:$0xf]
    %v910 = vld [vmem:[%s3 + $0x24] sm:$0xf]
    %v911 = vld [vmem:[%s3 + $0x28] sm:$0xf]
    %v912 = vld [vmem:[%s3 + $0x2c] sm:$0xf]
    %v913 = vld [vmem:[%s3 + $0x30] sm:$0xf]
    %v914 = vld [vmem:[%s3 + $0x34] sm:$0xf]
    %v915 = vld [vmem:[%s3 + $0x38] sm:$0xf]
    %v916 = vld [vmem:[%s3 + $0x3c] sm:$0xf]
    %v917 = vld [vmem:[%s4] sm:$0x1]
    %v919 = vlaneseq
    %v920 = vshrl.u32 %v919, 7
    %v921 = vsub.s32 0, %v920
    %v922 = vrot.slane %v917, %v921
    %v940 = vunpack.c.l.b16 %v901
    %v941 = vunpack.c.l.b16 %v902
    %v942 = vunpack.c.l.b16 %v903
    %v943 = vunpack.c.l.b16 %v904
    %v944 = vunpack.c.l.b16 %v905
    %v945 = vunpack.c.l.b16 %v906
    %v946 = vunpack.c.l.b16 %v907
    %v947 = vunpack.c.l.b16 %v908
    %v948 = vunpack.c.l.b16 %v909
    %v949 = vunpack.c.l.b16 %v910
    %v950 = vunpack.c.l.b16 %v911
    %v951 = vunpack.c.l.b16 %v912
    %v952 = vunpack.c.l.b16 %v913
    %v953 = vunpack.c.l.b16 %v914
    %v954 = vunpack.c.l.b16 %v915
    %v955 = vunpack.c.l.b16 %v916
    %v956 = vpack.c.b16 %v941, %v940
    %v957 = vpack.c.b16 %v943, %v942
    %v958 = vpack.c.b16 %v945, %v944
    %v959 = vpack.c.b16 %v947, %v946
    %v960 = vpack.c.b16 %v949, %v948
    %v961 = vpack.c.b16 %v951, %v950
    %v962 = vpack.c.b16 %v953, %v952
    %v963 = vpack.c.b16 %v955, %v954
    %972 = vmatprep.subr.bf16.mxu0 0
    %973 = vmatpush1.bf16.msra.mxu0 %v956
    %974 = vmatprep.subr.bf16.mxu0 0
    %975 = vmatpush1.bf16.msra.mxu0 %v957
    %976 = vmatprep.subr.bf16.mxu0 0
    %977 = vmatpush1.bf16.msra.mxu0 %v958
    %978 = vmatprep.subr.bf16.mxu0 0
    %979 = vmatpush1.bf16.msra.mxu0 %v959
    %980 = vmatprep.subr.bf16.mxu0 0
    %981 = vmatpush1.bf16.msra.mxu0 %v960
    %982 = vmatprep.subr.bf16.mxu0 0
    %983 = vmatpush1.bf16.msra.mxu0 %v961
    %984 = vmatprep.subr.bf16.mxu0 0
    %985 = vmatpush1.bf16.msra.mxu0 %v962
    %986 = vmatprep.subr.bf16.mxu0 0
    %987 = vmatpush1.bf16.msra.mxu0 %v963
    %988 = vmatprep.subr.bf16.mxu0 0
    %989 = vmatpush1.bf16.msra.mxu0 0
    %990 = vmatprep.subr.bf16.mxu0 0
    %991 = vmatpush1.bf16.msra.mxu0 0
    %992 = vmatprep.subr.bf16.mxu0 0
    %993 = vmatpush1.bf16.msra.mxu0 0
    %994 = vmatprep.subr.bf16.mxu0 0
    %995 = vmatpush1.bf16.msra.mxu0 0
    %996 = vmatprep.subr.bf16.mxu0 0
    %997 = vmatpush1.bf16.msra.mxu0 0
    %998 = vmatprep.subr.bf16.mxu0 0
    %999 = vmatpush1.bf16.msra.mxu0 0
    %1000 = vmatprep.subr.bf16.mxu0 0
    %1001 = vmatpush1.bf16.msra.mxu0 0
    %1002 = vmatprep.subr.bf16.mxu0 0
    %1003 = vmatpush1.bf16.msra.mxu0 0
    %1004 = vmatprep.mubr.bf16.mxu0 0
    %1005 = vmatmul.mubr.bf16.gmra.mrb[0].mxu0 %v900
    %v1006 = vpop.f32.mrb[0].mxu0
    %v1007 = vadd.f32 %v922, %v1006
    %v1008 = vpop.f32.mrb[0].mxu0
    %v1009 = vpop.f32.mrb[0].mxu0
    %v1010 = vpop.f32.mrb[0].mxu0
    %1011 = vdwg.mxu0
    %1012 = vst [vmem:[#allocation2] sm:$0xff] %v1007
    // Predicated region
    $region22: #{yolo_forward.5} parent=1 // pred_check
      _
    $region23: #{yolo_forward.5} parent=1 // pred_check_branch
      %1014 = sbr.rel (0) target = $region25
    $region24: #{yolo_forward.5} parent=1 // pred_region
      %s1016 = ssub.s32 128, 128
      %1017 = vsyncadd [#allocation3], %s1016
      %s1019 = sshll.u32 [#allocation2], 4
      %s1020 = int_to_ptr.vmem [resolvable:$true] %s1019
      %1022 = dma.vmem_to_hbm [thread:$0]  %s1020, 128, %s5, [#allocation3]
    $region25: #{yolo_forward.5} parent=1 // pred_fallthru
      _
    // Predicated region
    $region26: #{yolo_forward.5} parent=1 // pred_check
      _
    $region27: #{yolo_forward.5} parent=1 // pred_check_branch
      %1024 = sbr.rel (0) target = $region29
    $region28: #{yolo_forward.5} parent=1 // pred_region
      %1025 = dma.done [#allocation3], 128
    $region29: #{yolo_forward.5} parent=1 // pred_fallthru
      _
    %1026 = vsyncpa [#allocation3], 1

</llo_original>
